<compile_context>
chip_gen: v7x
topology: tpu7x:2x2x1
jax: 0.10.0
libtpu: 0.0.40
codegen_flags: <defaults>
</compile_context>

<pallas_src>
import functools

import jax
import jax.numpy as jnp
from jax.experimental import pallas as pl
from jax.experimental.pallas import tpu as pltpu

SELU_ALPHA = 1.6732632423543772848170429916717
SELU_SCALE = 1.0507009873554804934193349852946


def _round_up(n, m):
    return ((n + m - 1) // m) * m


def _selu(x):
    # torch.nn.SELU.  exp() is evaluated on min(x, 0) so the untaken branch
    # never overflows.  Runs in x.dtype (bf16 inside the kernel).
    neg = SELU_ALPHA * (jnp.exp(jnp.minimum(x, 0.0)) - 1.0)
    return SELU_SCALE * jnp.where(x > 0, x, neg)


def mlp_kernel(xin_ref, w1_ref, b1_ref, w2_ref, b2_ref,
               w3_ref, b3_ref, w4_ref, b4_ref, o_ref, xpad_ref):
    # xin_ref: (tm, K=dim+64) bf16 (un-padded).  Assemble the lane-dense
    # (tm, 128) layer-1 operand in VMEM scratch: zero the padding lanes, then
    # copy the real K columns.  (Zeroed every step: the grid axis is "parallel"
    # so a pid==0-only init would be wrong on multi-TC chips.)
    K = xin_ref.shape[-1]
    xpad_ref[...] = jnp.zeros_like(xpad_ref)
    xpad_ref[:, :K] = xin_ref[...]

    # bf16 operands, f32 MXU accumulation; bias add in f32, then cast once and
    # run SELU in bf16.
    h = jnp.dot(xpad_ref[...], w1_ref[...],
                preferred_element_type=jnp.float32) + b1_ref[...]
    h = _selu(h.astype(jnp.bfloat16))
    h = jnp.dot(h, w2_ref[...],
                preferred_element_type=jnp.float32) + b2_ref[...]
    h = _selu(h.astype(jnp.bfloat16))
    h = jnp.dot(h, w3_ref[...],
                preferred_element_type=jnp.float32) + b3_ref[...]
    h = _selu(h.astype(jnp.bfloat16))
    h = jnp.dot(h, w4_ref[...],
                preferred_element_type=jnp.float32) + b4_ref[...]
    o_ref[...] = h.astype(o_ref.dtype)   # bf16 output -> halves HBM writeback


def get_timestep_embedding(timesteps, embedding_dim):
    """Sinusoidal time embedding, matching the PyTorch reference."""
    half_dim = embedding_dim // 2
    emb_scale = jnp.log(jnp.float32(10000.0)) / (half_dim - 1)
    emb = jnp.exp(-emb_scale * jnp.arange(half_dim, dtype=jnp.float32))
    emb = timesteps.astype(jnp.float32)[:, None] * emb[None, :]
    emb = jnp.concatenate([jnp.sin(emb), jnp.cos(emb)], axis=1)
    if embedding_dim % 2 == 1:
        emb = jnp.pad(emb, ((0, 0), (0, 1)))
    return emb


def init_params(key, dim, w, time_dim):
    in_dim = dim + time_dim
    ks = jax.random.split(key, 8)
    scale = 0.02
    return {
        "w1": jax.random.normal(ks[0], (in_dim, w), jnp.float32) * scale,
        "b1": jax.random.normal(ks[1], (1, w), jnp.float32) * scale,
        "w2": jax.random.normal(ks[2], (w, w), jnp.float32) * scale,
        "b2": jax.random.normal(ks[3], (1, w), jnp.float32) * scale,
        "w3": jax.random.normal(ks[4], (w, w), jnp.float32) * scale,
        "b3": jax.random.normal(ks[5], (1, w), jnp.float32) * scale,
        "w4": jax.random.normal(ks[6], (w, dim), jnp.float32) * scale,
        "b4": jax.random.normal(ks[7], (1, dim), jnp.float32) * scale,
    }


def _choose_tile_and_vmem(B, K, k_pad, d_pad, W, block_b):
    """Pick the batch tile (rows) and a computed scoped-VMEM limit."""
    bf16, f32 = 2, 4
    # Weights/biases: conservatively assume the pipeline double-buffers them
    # even though their index_maps are constant.
    w_bytes = 2 * ((k_pad * W + 2 * W * W + W * d_pad) * bf16
                   + (3 * W + d_pad) * f32)
    # Per-batch-row cost: double-buffered in/out tiles, the layer-1 padding
    # scratch, and a generous allowance for live intermediates.
    per_row = (2 * K * bf16              # xin tile (2 pipeline buffers)
               + 2 * d_pad * bf16        # out tile (2 pipeline buffers)
               + k_pad * bf16            # layer-1 scratch
               + 2 * W * (f32 + bf16))   # f32 accumulator + bf16 activation (2x slack)
    budget = 28 << 20                    # working-set target; fits v5e/v6e/v7x
    max_rows = (budget - w_bytes) // per_row
    max_rows = max(128, (max_rows // 128) * 128)

    if B <= 128:
        tm = 128
    else:
        # >= 2 grid steps whenever B permits so the "parallel" axis can span
        # both TensorCores on v7x.
        tm = min(block_b, _round_up((B + 1) // 2, 128))
    tm = max(128, min(tm, max_rows))

    est = w_bytes + tm * per_row
    vmem_limit = int(min(max(2 * est + (4 << 20), 32 << 20), 56 << 20))
    return tm, vmem_limit


@functools.partial(jax.jit, static_argnames=("time_dim", "block_b"))
def mlp_forward(t, x, params, *, time_dim=64, block_b=1024):
    """Equivalent of MLP.forward(t, x); returns [B, dim] float32."""
    B, dim = x.shape
    W = params["w1"].shape[1]
    K = dim + time_dim                     # real contraction size (e.g. 80)

    k_pad = _round_up(K, 128)              # lane-dense layer-1 contraction
    d_pad = _round_up(dim, 128)            # lane-dense output
    tm, vmem_limit = _choose_tile_and_vmem(B, K, k_pad, d_pad, W, block_b)
    b_pad = _round_up(B, tm)

    # Timestep embedding + concat: one small fused XLA glue op.  NOT padded to
    # 128 lanes -- the kernel assembles the padded operand in VMEM scratch.
    temb = get_timestep_embedding(t, time_dim)                    # [B, time_dim]
    xin = jnp.concatenate([x.astype(jnp.float32), temb], axis=1)  # [B, K]
    xin = jnp.pad(xin.astype(jnp.bfloat16), ((0, b_pad - B), (0, 0)))

    # Weights in bf16 for the MXU (f32 accumulation in-kernel); biases f32.
    w1 = jnp.pad(params["w1"], ((0, k_pad - K), (0, 0))).astype(jnp.bfloat16)
    w2 = params["w2"].astype(jnp.bfloat16)
    w3 = params["w3"].astype(jnp.bfloat16)
    w4 = jnp.pad(params["w4"], ((0, 0), (0, d_pad - dim))).astype(jnp.bfloat16)
    b1 = params["b1"].astype(jnp.float32)
    b2 = params["b2"].astype(jnp.float32)
    b3 = params["b3"].astype(jnp.float32)
    b4 = jnp.pad(params["b4"], ((0, 0), (0, d_pad - dim))).astype(jnp.float32)

    const = lambda i: (0, 0)   # weights/biases: same block every step -> resident

    out = pl.pallas_call(
        mlp_kernel,
        out_shape=jax.ShapeDtypeStruct((b_pad, d_pad), jnp.bfloat16),
        grid=(b_pad // tm,),
        in_specs=[
            pl.BlockSpec((tm, K), lambda i: (i, 0)),   # xin tile (pipelined)
            pl.BlockSpec((k_pad, W), const),           # w1 (K padded to 128)
            pl.BlockSpec((1, W), const),               # b1
            pl.BlockSpec((W, W), const),               # w2
            pl.BlockSpec((1, W), const),               # b2
            pl.BlockSpec((W, W), const),               # w3
            pl.BlockSpec((1, W), const),               # b3
            pl.BlockSpec((W, d_pad), const),           # w4 (padded out lanes)
            pl.BlockSpec((1, d_pad), const),           # b4
        ],
        out_specs=pl.BlockSpec((tm, d_pad), lambda i: (i, 0)),
        scratch_shapes=[pltpu.VMEM((tm, k_pad), jnp.bfloat16)],   # layer-1 operand
        compiler_params=pltpu.CompilerParams(
            dimension_semantics=("parallel",),
            vmem_limit_bytes=vmem_limit),
    )(xin, w1, b1, w2, b2, w3, b3, w4, b4)

    return out[:B, :dim].astype(jnp.float32)


def mlp_reference(t, x, params, *, time_dim=64):
    """Pure-JAX reference mirroring the kernel's bf16-operand / f32-accum math."""
    def lin(h, w, b):
        return jnp.dot(h.astype(jnp.bfloat16), w.astype(jnp.bfloat16),
                       preferred_element_type=jnp.float32) + b.astype(jnp.float32)
    temb = get_timestep_embedding(t, time_dim)
    h = jnp.concatenate([x.astype(jnp.float32), temb], axis=1)
    h = _selu(lin(h, params["w1"], params["b1"]).astype(jnp.bfloat16))
    h = _selu(lin(h, params["w2"], params["b2"]).astype(jnp.bfloat16))
    h = _selu(lin(h, params["w3"], params["b3"]).astype(jnp.bfloat16))
    out = lin(h, params["w4"], params["b4"])
    return out.astype(jnp.bfloat16).astype(jnp.float32)


if __name__ == "__main__":
    # Small shapes: batch=2, dim=16, hidden width w=256, time_dim=64.
    B, DIM, W, TIME_DIM = 2, 16, 256, 64

    key = jax.random.PRNGKey(0)
    k_params, k_x, k_t = jax.random.split(key, 3)

    params = init_params(k_params, DIM, W, TIME_DIM)
    x = jax.random.normal(k_x, (B, DIM), jnp.float32)
    t = jax.random.uniform(k_t, (B,), jnp.float32) * 100.0

    out = mlp_forward(t, x, params, time_dim=TIME_DIM)
    out = jax.block_until_ready(out)

    ref = mlp_reference(t, x, params, time_dim=TIME_DIM)
    assert out.shape == (B, DIM)
    max_err = float(jnp.max(jnp.abs(out - ref)))
    assert jnp.allclose(out, ref, atol=2e-3, rtol=2e-2), (
        f"mismatch vs reference (max abs err {max_err:.3e})")

    print("KERNEL_OK")
</pallas_src>

<mosaic_0001>
module attributes {stable_mosaic.version = 11 : i64} {
  func.func @mlp_kernel(%arg0: i32, %arg1: memref<128x80xbf16, #tpu.memory_space<vmem>>, %arg2: memref<128x256xbf16, #tpu.memory_space<vmem>>, %arg3: memref<1x256xf32, #tpu.memory_space<vmem>>, %arg4: memref<256x256xbf16, #tpu.memory_space<vmem>>, %arg5: memref<1x256xf32, #tpu.memory_space<vmem>>, %arg6: memref<256x256xbf16, #tpu.memory_space<vmem>>, %arg7: memref<1x256xf32, #tpu.memory_space<vmem>>, %arg8: memref<256x128xbf16, #tpu.memory_space<vmem>>, %arg9: memref<1x128xf32, #tpu.memory_space<vmem>>, %arg10: memref<128x128xbf16, #tpu.memory_space<vmem>>, %arg11: memref<128x128xbf16, #tpu.memory_space<vmem>>) attributes {dimension_semantics = [#tpu.dimension_semantics<parallel>], iteration_bounds = array<i64: 1>, scalar_prefetch = 0 : i64, scratch_operands = 1 : i64, tpu.core_type = #tpu.core_type<tc>, window_params = [{transform_indices = @transform_0, window_bounds = array<i64: 128, 80>}, {pipeline_mode = #tpu.pipeline_mode<synchronous>, transform_indices = @transform_1, window_bounds = array<i64: 128, 256>}, {pipeline_mode = #tpu.pipeline_mode<synchronous>, transform_indices = @transform_2, window_bounds = array<i64: 1, 256>}, {pipeline_mode = #tpu.pipeline_mode<synchronous>, transform_indices = @transform_3, window_bounds = array<i64: 256, 256>}, {pipeline_mode = #tpu.pipeline_mode<synchronous>, transform_indices = @transform_4, window_bounds = array<i64: 1, 256>}, {pipeline_mode = #tpu.pipeline_mode<synchronous>, transform_indices = @transform_5, window_bounds = array<i64: 256, 256>}, {pipeline_mode = #tpu.pipeline_mode<synchronous>, transform_indices = @transform_6, window_bounds = array<i64: 1, 256>}, {pipeline_mode = #tpu.pipeline_mode<synchronous>, transform_indices = @transform_7, window_bounds = array<i64: 256, 128>}, {pipeline_mode = #tpu.pipeline_mode<synchronous>, transform_indices = @transform_8, window_bounds = array<i64: 1, 128>}, {transform_indices = @transform_9, window_bounds = array<i64: 128, 128>}]} {
    %cst = arith.constant 0.000000e+00 : bf16
    %0 = vector.broadcast %cst : bf16 to vector<128x128xbf16>
    %c0 = arith.constant 0 : index
    %c0_0 = arith.constant 0 : index
    %1 = vector.load %arg11[%c0, %c0_0] : memref<128x128xbf16, #tpu.memory_space<vmem>>, vector<128x128xbf16>
    tpu.vector_store %arg11[%c0, %c0_0], %0 {strides = array<i32>} : memref<128x128xbf16, #tpu.memory_space<vmem>>, vector<128x128xbf16>,
    %c0_1 = arith.constant 0 : index
    %c0_2 = arith.constant 0 : index
    %2 = vector.load %arg1[%c0_1, %c0_2] : memref<128x80xbf16, #tpu.memory_space<vmem>>, vector<128x80xbf16>
    %c0_3 = arith.constant 0 : index
    %c0_4 = arith.constant 0 : index
    %3 = vector.load %arg11[%c0_3, %c0_4] : memref<128x128xbf16, #tpu.memory_space<vmem>>, vector<128x80xbf16>
    tpu.vector_store %arg11[%c0_3, %c0_4], %2 {strides = array<i32>} : memref<128x128xbf16, #tpu.memory_space<vmem>>, vector<128x80xbf16>,
    %c0_5 = arith.constant 0 : index
    %c0_6 = arith.constant 0 : index
    %4 = vector.load %arg11[%c0_5, %c0_6] : memref<128x128xbf16, #tpu.memory_space<vmem>>, vector<128x128xbf16>
    %c0_7 = arith.constant 0 : index
    %c0_8 = arith.constant 0 : index
    %5 = vector.load %arg2[%c0_7, %c0_8] : memref<128x256xbf16, #tpu.memory_space<vmem>>, vector<128x256xbf16>
    %cst_9 = arith.constant dense<0.000000e+00> : vector<128x256xf32>
    %6 = tpu.matmul %4, %5, %cst_9 {dimension_numbers = #tpu.dot_dimension_numbers<[1], [0], [0], [1], [0, 0, 1, 1], [], []>} : vector<128x128xbf16>, vector<128x256xbf16>, vector<128x256xf32> -> vector<128x256xf32>
    %c0_10 = arith.constant 0 : index
    %c0_11 = arith.constant 0 : index
    %7 = vector.load %arg3[%c0_10, %c0_11] : memref<1x256xf32, #tpu.memory_space<vmem>>, vector<1x256xf32>
    %8 = vector.broadcast %7 : vector<1x256xf32> to vector<128x256xf32>
    %9 = arith.addf %6, %8 : vector<128x256xf32>
    %10 = arith.truncf %9 : vector<128x256xf32> to vector<128x256xbf16>
    %cst_12 = arith.constant 0.000000e+00 : bf16
    %11 = vector.broadcast %cst_12 : bf16 to vector<128x256xbf16>
    %12 = arith.minimumf %10, %11 : vector<128x256xbf16>
    %13 = math.exp %12 : vector<128x256xbf16>
    %cst_13 = arith.constant 1.000000e+00 : bf16
    %14 = vector.broadcast %cst_13 : bf16 to vector<128x256xbf16>
    %15 = arith.subf %13, %14 : vector<128x256xbf16>
    %cst_14 = arith.constant 1.671880e+00 : bf16
    %16 = vector.broadcast %cst_14 : bf16 to vector<128x256xbf16>
    %17 = arith.mulf %16, %15 : vector<128x256xbf16>
    %cst_15 = arith.constant 0.000000e+00 : bf16
    %18 = vector.broadcast %cst_15 : bf16 to vector<128x256xbf16>
    %19 = arith.cmpf ogt, %10, %18 : vector<128x256xbf16>
    %20 = arith.select %19, %10, %17 : vector<128x256xi1>, vector<128x256xbf16>
    %cst_16 = arith.constant 1.046880e+00 : bf16
    %21 = vector.broadcast %cst_16 : bf16 to vector<128x256xbf16>
    %22 = arith.mulf %21, %20 : vector<128x256xbf16>
    %c0_17 = arith.constant 0 : index
    %c0_18 = arith.constant 0 : index
    %23 = vector.load %arg4[%c0_17, %c0_18] : memref<256x256xbf16, #tpu.memory_space<vmem>>, vector<256x256xbf16>
    %cst_19 = arith.constant dense<0.000000e+00> : vector<128x256xf32>
    %24 = tpu.matmul %22, %23, %cst_19 {dimension_numbers = #tpu.dot_dimension_numbers<[1], [0], [0], [1], [0, 0, 1, 1], [], []>} : vector<128x256xbf16>, vector<256x256xbf16>, vector<128x256xf32> -> vector<128x256xf32>
    %c0_20 = arith.constant 0 : index
    %c0_21 = arith.constant 0 : index
    %25 = vector.load %arg5[%c0_20, %c0_21] : memref<1x256xf32, #tpu.memory_space<vmem>>, vector<1x256xf32>
    %26 = vector.broadcast %25 : vector<1x256xf32> to vector<128x256xf32>
    %27 = arith.addf %24, %26 : vector<128x256xf32>
    %28 = arith.truncf %27 : vector<128x256xf32> to vector<128x256xbf16>
    %cst_22 = arith.constant 0.000000e+00 : bf16
    %29 = vector.broadcast %cst_22 : bf16 to vector<128x256xbf16>
    %30 = arith.minimumf %28, %29 : vector<128x256xbf16>
    %31 = math.exp %30 : vector<128x256xbf16>
    %cst_23 = arith.constant 1.000000e+00 : bf16
    %32 = vector.broadcast %cst_23 : bf16 to vector<128x256xbf16>
    %33 = arith.subf %31, %32 : vector<128x256xbf16>
    %cst_24 = arith.constant 1.671880e+00 : bf16
    %34 = vector.broadcast %cst_24 : bf16 to vector<128x256xbf16>
    %35 = arith.mulf %34, %33 : vector<128x256xbf16>
    %cst_25 = arith.constant 0.000000e+00 : bf16
    %36 = vector.broadcast %cst_25 : bf16 to vector<128x256xbf16>
    %37 = arith.cmpf ogt, %28, %36 : vector<128x256xbf16>
    %38 = arith.select %37, %28, %35 : vector<128x256xi1>, vector<128x256xbf16>
    %cst_26 = arith.constant 1.046880e+00 : bf16
    %39 = vector.broadcast %cst_26 : bf16 to vector<128x256xbf16>
    %40 = arith.mulf %39, %38 : vector<128x256xbf16>
    %c0_27 = arith.constant 0 : index
    %c0_28 = arith.constant 0 : index
    %41 = vector.load %arg6[%c0_27, %c0_28] : memref<256x256xbf16, #tpu.memory_space<vmem>>, vector<256x256xbf16>
    %cst_29 = arith.constant dense<0.000000e+00> : vector<128x256xf32>
    %42 = tpu.matmul %40, %41, %cst_29 {dimension_numbers = #tpu.dot_dimension_numbers<[1], [0], [0], [1], [0, 0, 1, 1], [], []>} : vector<128x256xbf16>, vector<256x256xbf16>, vector<128x256xf32> -> vector<128x256xf32>
    %c0_30 = arith.constant 0 : index
    %c0_31 = arith.constant 0 : index
    %43 = vector.load %arg7[%c0_30, %c0_31] : memref<1x256xf32, #tpu.memory_space<vmem>>, vector<1x256xf32>
    %44 = vector.broadcast %43 : vector<1x256xf32> to vector<128x256xf32>
    %45 = arith.addf %42, %44 : vector<128x256xf32>
    %46 = arith.truncf %45 : vector<128x256xf32> to vector<128x256xbf16>
    %cst_32 = arith.constant 0.000000e+00 : bf16
    %47 = vector.broadcast %cst_32 : bf16 to vector<128x256xbf16>
    %48 = arith.minimumf %46, %47 : vector<128x256xbf16>
    %49 = math.exp %48 : vector<128x256xbf16>
    %cst_33 = arith.constant 1.000000e+00 : bf16
    %50 = vector.broadcast %cst_33 : bf16 to vector<128x256xbf16>
    %51 = arith.subf %49, %50 : vector<128x256xbf16>
    %cst_34 = arith.constant 1.671880e+00 : bf16
    %52 = vector.broadcast %cst_34 : bf16 to vector<128x256xbf16>
    %53 = arith.mulf %52, %51 : vector<128x256xbf16>
    %cst_35 = arith.constant 0.000000e+00 : bf16
    %54 = vector.broadcast %cst_35 : bf16 to vector<128x256xbf16>
    %55 = arith.cmpf ogt, %46, %54 : vector<128x256xbf16>
    %56 = arith.select %55, %46, %53 : vector<128x256xi1>, vector<128x256xbf16>
    %cst_36 = arith.constant 1.046880e+00 : bf16
    %57 = vector.broadcast %cst_36 : bf16 to vector<128x256xbf16>
    %58 = arith.mulf %57, %56 : vector<128x256xbf16>
    %c0_37 = arith.constant 0 : index
    %c0_38 = arith.constant 0 : index
    %59 = vector.load %arg8[%c0_37, %c0_38] : memref<256x128xbf16, #tpu.memory_space<vmem>>, vector<256x128xbf16>
    %cst_39 = arith.constant dense<0.000000e+00> : vector<128x128xf32>
    %60 = tpu.matmul %58, %59, %cst_39 {dimension_numbers = #tpu.dot_dimension_numbers<[1], [0], [0], [1], [0, 0, 1, 1], [], []>} : vector<128x256xbf16>, vector<256x128xbf16>, vector<128x128xf32> -> vector<128x128xf32>
    %c0_40 = arith.constant 0 : index
    %c0_41 = arith.constant 0 : index
    %61 = vector.load %arg9[%c0_40, %c0_41] : memref<1x128xf32, #tpu.memory_space<vmem>>, vector<1x128xf32>
    %62 = vector.broadcast %61 : vector<1x128xf32> to vector<128x128xf32>
    %63 = arith.addf %60, %62 : vector<128x128xf32>
    %64 = arith.truncf %63 : vector<128x128xf32> to vector<128x128xbf16>
    %c0_42 = arith.constant 0 : index
    %c0_43 = arith.constant 0 : index
    %65 = vector.load %arg10[%c0_42, %c0_43] : memref<128x128xbf16, #tpu.memory_space<vmem>>, vector<128x128xbf16>
    tpu.vector_store %arg10[%c0_42, %c0_43], %64 {strides = array<i32>} : memref<128x128xbf16, #tpu.memory_space<vmem>>, vector<128x128xbf16>,
    return
  }
  func.func @transform_0(%arg0: i32) -> (i32, i32) {
    %c0_i32 = arith.constant 0 : i32
    %c0_i32_0 = arith.constant 0 : i32
    return %arg0, %c0_i32 : i32, i32
  }
  func.func @transform_1(%arg0: i32) -> (i32, i32) {
    %c0_i32 = arith.constant 0 : i32
    %c0_i32_0 = arith.constant 0 : i32
    %c0_i32_1 = arith.constant 0 : i32
    return %c0_i32, %c0_i32_0 : i32, i32
  }
  func.func @transform_2(%arg0: i32) -> (i32, i32) {
    %c0_i32 = arith.constant 0 : i32
    %c0_i32_0 = arith.constant 0 : i32
    %c0_i32_1 = arith.constant 0 : i32
    return %c0_i32, %c0_i32_0 : i32, i32
  }
  func.func @transform_3(%arg0: i32) -> (i32, i32) {
    %c0_i32 = arith.constant 0 : i32
    %c0_i32_0 = arith.constant 0 : i32
    %c0_i32_1 = arith.constant 0 : i32
    return %c0_i32, %c0_i32_0 : i32, i32
  }
  func.func @transform_4(%arg0: i32) -> (i32, i32) {
    %c0_i32 = arith.constant 0 : i32
    %c0_i32_0 = arith.constant 0 : i32
    %c0_i32_1 = arith.constant 0 : i32
    return %c0_i32, %c0_i32_0 : i32, i32
  }
  func.func @transform_5(%arg0: i32) -> (i32, i32) {
    %c0_i32 = arith.constant 0 : i32
    %c0_i32_0 = arith.constant 0 : i32
    %c0_i32_1 = arith.constant 0 : i32
    return %c0_i32, %c0_i32_0 : i32, i32
  }
  func.func @transform_6(%arg0: i32) -> (i32, i32) {
    %c0_i32 = arith.constant 0 : i32
    %c0_i32_0 = arith.constant 0 : i32
    %c0_i32_1 = arith.constant 0 : i32
    return %c0_i32, %c0_i32_0 : i32, i32
  }
  func.func @transform_7(%arg0: i32) -> (i32, i32) {
    %c0_i32 = arith.constant 0 : i32
    %c0_i32_0 = arith.constant 0 : i32
    %c0_i32_1 = arith.constant 0 : i32
    return %c0_i32, %c0_i32_0 : i32, i32
  }
  func.func @transform_8(%arg0: i32) -> (i32, i32) {
    %c0_i32 = arith.constant 0 : i32
    %c0_i32_0 = arith.constant 0 : i32
    %c0_i32_1 = arith.constant 0 : i32
    return %c0_i32, %c0_i32_0 : i32, i32
  }
  func.func @transform_9(%arg0: i32) -> (i32, i32) {
    %c0_i32 = arith.constant 0 : i32
    %c0_i32_0 = arith.constant 0 : i32
    return %arg0, %c0_i32 : i32, i32
  }
}

</mosaic_0001>

<llo_original>
// kernel: mlp_forward.1
$region0: #{mlp_forward.1}
  #allocation0 [shape = 'u32[]', space=smem, size = 0x4, offset = 0x4, fixed_abs, tag = 'smem constant byte address 0x4 - core index']
  #allocation1 [shape = 'u32[144,128]{1,0:T(1,128)}', space=vmem, size = 0x12000, scoped, tag = 'internal scratch']
  #allocation2 [shape = 'bf16[128,128]{1,0:T(16,128)(2,1)}', space=vmem, size = 0x8000, scoped, tag = 'scratch operand']
  %s0 = inlined_call_operand.vmem [shape: bf16[128,80], index: 0, kind: input, shape index: {}]
  %s1 = inlined_call_operand.vmem [shape: bf16[128,256], index: 1, kind: input, shape index: {}]
  %s2 = inlined_call_operand.vmem [shape: f32[1,256], index: 2, kind: input, shape index: {}]
  %s3 = inlined_call_operand.vmem [shape: bf16[256,256], index: 3, kind: input, shape index: {}]
  %s4 = inlined_call_operand.vmem [shape: f32[1,256], index: 4, kind: input, shape index: {}]
  %s5 = inlined_call_operand.vmem [shape: bf16[256,256], index: 5, kind: input, shape index: {}]
  %s6 = inlined_call_operand.vmem [shape: f32[1,256], index: 6, kind: input, shape index: {}]
  %s7 = inlined_call_operand.vmem [shape: bf16[256,128], index: 7, kind: input, shape index: {}]
  %s8 = inlined_call_operand.vmem [shape: f32[1,128], index: 8, kind: input, shape index: {}]
  %s9 = inlined_call_operand.vmem [shape: bf16[128,128], index: 9, kind: output, shape index: {}]
  %s10 = sld [smem:[#allocation0]]
  $region46: #{mlp_forward.1} parent=0
    _
  %s12 = ssub.s32 1, %s10
  %s13 = scalar_select 0, %s12, %s10
  // Predicated region
  $region2: #{mlp_forward.1} parent=0 // pred_check
    _
  $region3: #{mlp_forward.1} parent=0 // pred_check_branch
    %15 = sbr.rel (0) target = $region5
  $region4: #{mlp_forward.1} parent=0 // pred_region
    _
  $region5: #{mlp_forward.1} parent=0 // pred_fallthru
    _
  // Predicated region
  $region6: #{mlp_forward.1} parent=0 // pred_check
    _
  $region7: #{mlp_forward.1} parent=0 // pred_check_branch
    %17 = sbr.rel (0) target = $region9
  $region8: #{mlp_forward.1} parent=0 // pred_region
    _
  $region9: #{mlp_forward.1} parent=0 // pred_fallthru
    _
  // Predicated region
  $region10: #{mlp_forward.1} parent=0 // pred_check
    _
  $region11: #{mlp_forward.1} parent=0 // pred_check_branch
    %19 = sbr.rel (0) target = $region13
  $region12: #{mlp_forward.1} parent=0 // pred_region
    _
  $region13: #{mlp_forward.1} parent=0 // pred_fallthru
    _
  // Predicated region
  $region14: #{mlp_forward.1} parent=0 // pred_check
    _
  $region15: #{mlp_forward.1} parent=0 // pred_check_branch
    %21 = sbr.rel (0) target = $region17
  $region16: #{mlp_forward.1} parent=0 // pred_region
    _
  $region17: #{mlp_forward.1} parent=0 // pred_fallthru
    _
  // Predicated region
  $region18: #{mlp_forward.1} parent=0 // pred_check
    _
  $region19: #{mlp_forward.1} parent=0 // pred_check_branch
    %23 = sbr.rel (0) target = $region21
  $region20: #{mlp_forward.1} parent=0 // pred_region
    _
  $region21: #{mlp_forward.1} parent=0 // pred_fallthru
    _
  // Predicated region
  $region22: #{mlp_forward.1} parent=0 // pred_check
    _
  $region23: #{mlp_forward.1} parent=0 // pred_check_branch
    %25 = sbr.rel (0) target = $region25
  $region24: #{mlp_forward.1} parent=0 // pred_region
    _
  $region25: #{mlp_forward.1} parent=0 // pred_fallthru
    _
  // Predicated region
  $region26: #{mlp_forward.1} parent=0 // pred_check
    _
  $region27: #{mlp_forward.1} parent=0 // pred_check_branch
    %27 = sbr.rel (0) target = $region29
  $region28: #{mlp_forward.1} parent=0 // pred_region
    _
  $region29: #{mlp_forward.1} parent=0 // pred_fallthru
    _
  // Predicated region
  $region30: #{mlp_forward.1} parent=0 // pred_check
    _
  $region31: #{mlp_forward.1} parent=0 // pred_check_branch
    %29 = sbr.rel (0) target = $region33
  $region32: #{mlp_forward.1} parent=0 // pred_region
    _
  $region33: #{mlp_forward.1} parent=0 // pred_fallthru
    _
  // Predicated region
  $region34: #{mlp_forward.1} parent=0 // pred_check
    _
  $region35: #{mlp_forward.1} parent=0 // pred_check_branch
    %31 = sbr.rel (0) target = $region37
  $region36: #{mlp_forward.1} parent=0 // pred_region
    _
  $region37: #{mlp_forward.1} parent=0 // pred_fallthru
    _
  %36 = vst [vmem:[#allocation2] sm:$0xff] 0
  %37 = vst [vmem:[#allocation2 + $0x8] sm:$0xff] 0
  %38 = vst [vmem:[#allocation2 + $0x10] sm:$0xff] 0
  %39 = vst [vmem:[#allocation2 + $0x18] sm:$0xff] 0
  %40 = vst [vmem:[#allocation2 + $0x20] sm:$0xff] 0
  %41 = vst [vmem:[#allocation2 + $0x28] sm:$0xff] 0
  %42 = vst [vmem:[#allocation2 + $0x30] sm:$0xff] 0
  %43 = vst [vmem:[#allocation2 + $0x38] sm:$0xff] 0
  %v44 = vld [vmem:[%s0] sm:$0xf]
  %v45 = vld [vmem:[%s0 + $0x4] sm:$0xf]
  %v46 = vld [vmem:[%s0 + $0x8] sm:$0xf]
  %v47 = vld [vmem:[%s0 + $0xc] sm:$0xf]
  %v48 = vld [vmem:[%s0 + $0x10] sm:$0xf]
  %v49 = vld [vmem:[%s0 + $0x14] sm:$0xf]
  %v50 = vld [vmem:[%s0 + $0x18] sm:$0xf]
  %v51 = vld [vmem:[%s0 + $0x1c] sm:$0xf]
  %v52 = vld [vmem:[%s0 + $0x20] sm:$0xf]
  %v53 = vld [vmem:[%s0 + $0x24] sm:$0xf]
  %v54 = vld [vmem:[%s0 + $0x28] sm:$0xf]
  %v55 = vld [vmem:[%s0 + $0x2c] sm:$0xf]
  %v56 = vld [vmem:[%s0 + $0x30] sm:$0xf]
  %v57 = vld [vmem:[%s0 + $0x34] sm:$0xf]
  %v58 = vld [vmem:[%s0 + $0x38] sm:$0xf]
  %v59 = vld [vmem:[%s0 + $0x3c] sm:$0xf]
  %v76 = vunpack.c.l.b16 %v44
  %v77 = vunpack.c.l.b16 %v45
  %v78 = vunpack.c.l.b16 %v46
  %v79 = vunpack.c.l.b16 %v47
  %v80 = vunpack.c.l.b16 %v48
  %v81 = vunpack.c.l.b16 %v49
  %v82 = vunpack.c.l.b16 %v50
  %v83 = vunpack.c.l.b16 %v51
  %v84 = vunpack.c.l.b16 %v52
  %v85 = vunpack.c.l.b16 %v53
  %v86 = vunpack.c.l.b16 %v54
  %v87 = vunpack.c.l.b16 %v55
  %v88 = vunpack.c.l.b16 %v56
  %v89 = vunpack.c.l.b16 %v57
  %v90 = vunpack.c.l.b16 %v58
  %v91 = vunpack.c.l.b16 %v59
  %v92 = vpack.c.b16 %v77, %v76
  %v93 = vpack.c.b16 %v79, %v78
  %v94 = vpack.c.b16 %v81, %v80
  %v95 = vpack.c.b16 %v83, %v82
  %v96 = vpack.c.b16 %v85, %v84
  %v97 = vpack.c.b16 %v87, %v86
  %v98 = vpack.c.b16 %v89, %v88
  %v99 = vpack.c.b16 %v91, %v90
  %vm108 = vcmask 654336
  %109 = vst.msk [vmem:[#allocation2] sm:$0xff] %vm108, %v92
  %110 = vst.msk [vmem:[#allocation2 + $0x8] sm:$0xff] %vm108, %v93
  %111 = vst.msk [vmem:[#allocation2 + $0x10] sm:$0xff] %vm108, %v94
  %112 = vst.msk [vmem:[#allocation2 + $0x18] sm:$0xff] %vm108, %v95
  %113 = vst.msk [vmem:[#allocation2 + $0x20] sm:$0xff] %vm108, %v96
  %114 = vst.msk [vmem:[#allocation2 + $0x28] sm:$0xff] %vm108, %v97
  %115 = vst.msk [vmem:[#allocation2 + $0x30] sm:$0xff] %vm108, %v98
  %116 = vst.msk [vmem:[#allocation2 + $0x38] sm:$0xff] %vm108, %v99
  %v117 = vld [vmem:[#allocation2] sm:$0xff]
  %v118 = vld [vmem:[#allocation2 + $0x8] sm:$0xff]
  %v119 = vld [vmem:[#allocation2 + $0x10] sm:$0xff]
  %v120 = vld [vmem:[#allocation2 + $0x18] sm:$0xff]
  %v121 = vld [vmem:[#allocation2 + $0x20] sm:$0xff]
  %v122 = vld [vmem:[#allocation2 + $0x28] sm:$0xff]
  %v123 = vld [vmem:[#allocation2 + $0x30] sm:$0xff]
  %v124 = vld [vmem:[#allocation2 + $0x38] sm:$0xff]
  %v125 = vld [vmem:[%s1] sm:$0xff]
  %v126 = vld [vmem:[%s1 + $0x8] sm:$0xff]
  %v127 = vld [vmem:[%s1 + $0x10] sm:$0xff]
  %v128 = vld [vmem:[%s1 + $0x18] sm:$0xff]
  %v129 = vld [vmem:[%s1 + $0x20] sm:$0xff]
  %v130 = vld [vmem:[%s1 + $0x28] sm:$0xff]
  %v131 = vld [vmem:[%s1 + $0x30] sm:$0xff]
  %v132 = vld [vmem:[%s1 + $0x38] sm:$0xff]
  %v133 = vld [vmem:[%s1 + $0x40] sm:$0xff]
  %v134 = vld [vmem:[%s1 + $0x48] sm:$0xff]
  %v135 = vld [vmem:[%s1 + $0x50] sm:$0xff]
  %v136 = vld [vmem:[%s1 + $0x58] sm:$0xff]
  %v137 = vld [vmem:[%s1 + $0x60] sm:$0xff]
  %v138 = vld [vmem:[%s1 + $0x68] sm:$0xff]
  %v139 = vld [vmem:[%s1 + $0x70] sm:$0xff]
  %v140 = vld [vmem:[%s1 + $0x78] sm:$0xff]
  %v141 = vld [vmem:[%s2] sm:$0x3]
  %v143 = vlaneseq
  %v144 = vshrl.u32 %v143, 7
  %v145 = vsub.s32 0, %v144
  %v146 = vrot.slane %v141, %v145
  %v147 = vlaneseq
  %v148 = vshrl.u32 %v147, 7
  %v149 = vsub.s32 1, %v148
  %v150 = vrot.slane %v141, %v149
  %v169 = vunpack.c.l.b16 %v125
  %v170 = vunpack.c.h.b16 %v125
  %v171 = vunpack.c.l.b16 %v126
  %v172 = vunpack.c.h.b16 %v126
  %v173 = vunpack.c.l.b16 %v127
  %v174 = vunpack.c.h.b16 %v127
  %v175 = vunpack.c.l.b16 %v128
  %v176 = vunpack.c.h.b16 %v128
  %v177 = vunpack.c.l.b16 %v129
  %v178 = vunpack.c.h.b16 %v129
  %v179 = vunpack.c.l.b16 %v130
  %v180 = vunpack.c.h.b16 %v130
  %v181 = vunpack.c.l.b16 %v131
  %v182 = vunpack.c.h.b16 %v131
  %v183 = vunpack.c.l.b16 %v132
  %v184 = vunpack.c.h.b16 %v132
  %v185 = vunpack.c.l.b16 %v133
  %v186 = vunpack.c.h.b16 %v133
  %v187 = vunpack.c.l.b16 %v134
  %v188 = vunpack.c.h.b16 %v134
  %v189 = vunpack.c.l.b16 %v135
  %v190 = vunpack.c.h.b16 %v135
  %v191 = vunpack.c.l.b16 %v136
  %v192 = vunpack.c.h.b16 %v136
  %v193 = vunpack.c.l.b16 %v137
  %v194 = vunpack.c.h.b16 %v137
  %v195 = vunpack.c.l.b16 %v138
  %v196 = vunpack.c.h.b16 %v138
  %v197 = vunpack.c.l.b16 %v139
  %v198 = vunpack.c.h.b16 %v139
  %v199 = vunpack.c.l.b16 %v140
  %v200 = vunpack.c.h.b16 %v140
  %v201 = vpack.c.b16 %v171, %v169
  %v202 = vpack.c.b16 %v172, %v170
  %v203 = vpack.c.b16 %v175, %v173
  %v204 = vpack.c.b16 %v176, %v174
  %v205 = vpack.c.b16 %v179, %v177
  %v206 = vpack.c.b16 %v180, %v178
  %v207 = vpack.c.b16 %v183, %v181
  %v208 = vpack.c.b16 %v184, %v182
  %v209 = vpack.c.b16 %v187, %v185
  %v210 = vpack.c.b16 %v188, %v186
  %v211 = vpack.c.b16 %v191, %v189
  %v212 = vpack.c.b16 %v192, %v190
  %v213 = vpack.c.b16 %v195, %v193
  %v214 = vpack.c.b16 %v196, %v194
  %v215 = vpack.c.b16 %v199, %v197
  %v216 = vpack.c.b16 %v200, %v198
  %233 = vmatprep.subr.bf16.mxu0 %v202
  %234 = vmatpush1.bf16.msra.mxu0 %v201
  %235 = vmatprep.subr.bf16.mxu0 %v204
  %236 = vmatpush1.bf16.msra.mxu0 %v203
  %237 = vmatprep.subr.bf16.mxu0 %v206
  %238 = vmatpush1.bf16.msra.mxu0 %v205
  %239 = vmatprep.subr.bf16.mxu0 %v208
  %240 = vmatpush1.bf16.msra.mxu0 %v207
  %241 = vmatprep.subr.bf16.mxu0 %v210
  %242 = vmatpush1.bf16.msra.mxu0 %v209
  %243 = vmatprep.subr.bf16.mxu0 %v212
  %244 = vmatpush1.bf16.msra.mxu0 %v211
  %245 = vmatprep.subr.bf16.mxu0 %v214
  %246 = vmatpush1.bf16.msra.mxu0 %v213
  %247 = vmatprep.subr.bf16.mxu0 %v216
  %248 = vmatpush1.bf16.msra.mxu0 %v215
  %249 = vmatprep.subr.bf16.mxu0 0
  %250 = vmatpush1.bf16.msra.mxu0 0
  %251 = vmatprep.subr.bf16.mxu0 0
  %252 = vmatpush1.bf16.msra.mxu0 0
  %253 = vmatprep.subr.bf16.mxu0 0
  %254 = vmatpush1.bf16.msra.mxu0 0
  %255 = vmatprep.subr.bf16.mxu0 0
  %256 = vmatpush1.bf16.msra.mxu0 0
  %257 = vmatprep.subr.bf16.mxu0 0
  %258 = vmatpush1.bf16.msra.mxu0 0
  %259 = vmatprep.subr.bf16.mxu0 0
  %260 = vmatpush1.bf16.msra.mxu0 0
  %261 = vmatprep.subr.bf16.mxu0 0
  %262 = vmatpush1.bf16.msra.mxu0 0
  %263 = vmatprep.subr.bf16.mxu0 0
  %264 = vmatpush1.bf16.msra.mxu0 0
  %265 = vmatprep.mubr.bf16.mxu0 0
  %266 = vmatmul.mubr.bf16.gmra.mrb[0].mxu0 %v117
  %v267 = vpop.f32.mrb[0].mxu0
  %v268 = vadd.f32 %v146, %v267
  %v269 = vpop.f32.mrb[0].mxu0
  %v270 = vadd.f32 %v150, %v269
  %v271 = vpop.f32.mrb[0].mxu0
  %v272 = vadd.f32 %v146, %v271
  %v273 = vpop.f32.mrb[0].mxu0
  %v274 = vadd.f32 %v150, %v273
  %275 = vmatprep.mubr.bf16.mxu0 0
  %276 = vmatmul.mubr.bf16.gmra.mrb[0].mxu0 %v118
  %v277 = vpop.f32.mrb[0].mxu0
  %v278 = vadd.f32 %v146, %v277
  %v279 = vpop.f32.mrb[0].mxu0
  %v280 = vadd.f32 %v150, %v279
  %v281 = vpop.f32.mrb[0].mxu0
  %v282 = vadd.f32 %v146, %v281
  %v283 = vpop.f32.mrb[0].mxu0
  %v284 = vadd.f32 %v150, %v283
  %285 = vmatprep.mubr.bf16.mxu0 0
  %286 = vmatmul.mubr.bf16.gmra.mrb[0].mxu0 %v119
  %v287 = vpop.f32.mrb[0].mxu0
  %v288 = vadd.f32 %v146, %v287
  %v289 = vpop.f32.mrb[0].mxu0
  %v290 = vadd.f32 %v150, %v289
  %v291 = vpop.f32.mrb[0].mxu0
  %v292 = vadd.f32 %v146, %v291
  %v293 = vpop.f32.mrb[0].mxu0
  %v294 = vadd.f32 %v150, %v293
  %295 = vmatprep.mubr.bf16.mxu0 0
  %296 = vmatmul.mubr.bf16.gmra.mrb[0].mxu0 %v120
  %v297 = vpop.f32.mrb[0].mxu0
  %v298 = vadd.f32 %v146, %v297
  %v299 = vpop.f32.mrb[0].mxu0
  %v300 = vadd.f32 %v150, %v299
  %v301 = vpop.f32.mrb[0].mxu0
  %v302 = vadd.f32 %v146, %v301
  %v303 = vpop.f32.mrb[0].mxu0
  %v304 = vadd.f32 %v150, %v303
  %305 = vmatprep.mubr.bf16.mxu0 0
  %306 = vmatmul.mubr.bf16.gmra.mrb[0].mxu0 %v121
  %v307 = vpop.f32.mrb[0].mxu0
  %v308 = vadd.f32 %v146, %v307
  %v309 = vpop.f32.mrb[0].mxu0
  %v310 = vadd.f32 %v150, %v309
  %v311 = vpop.f32.mrb[0].mxu0
  %v312 = vadd.f32 %v146, %v311
  %v313 = vpop.f32.mrb[0].mxu0
  %v314 = vadd.f32 %v150, %v313
  %315 = vmatprep.mubr.bf16.mxu0 0
  %316 = vmatmul.mubr.bf16.gmra.mrb[0].mxu0 %v122
  %v317 = vpop.f32.mrb[0].mxu0
  %v318 = vadd.f32 %v146, %v317
  %v319 = vpop.f32.mrb[0].mxu0
  %v320 = vadd.f32 %v150, %v319
  %v321 = vpop.f32.mrb[0].mxu0
  %v322 = vadd.f32 %v146, %v321
  %v323 = vpop.f32.mrb[0].mxu0
  %v324 = vadd.f32 %v150, %v323
  %325 = vmatprep.mubr.bf16.mxu0 0
  %326 = vmatmul.mubr.bf16.gmra.mrb[0].mxu0 %v123
  %v327 = vpop.f32.mrb[0].mxu0
  %v328 = vadd.f32 %v146, %v327
  %v329 = vpop.f32.mrb[0].mxu0
  %v330 = vadd.f32 %v150, %v329
  %v331 = vpop.f32.mrb[0].mxu0
  %v332 = vadd.f32 %v146, %v331
  %v333 = vpop.f32.mrb[0].mxu0
  %v334 = vadd.f32 %v150, %v333
  %335 = vmatprep.mubr.bf16.mxu0 0
  %336 = vmatmul.mubr.bf16.gmra.mrb[0].mxu0 %v124
  %v337 = vpop.f32.mrb[0].mxu0
  %v338 = vadd.f32 %v146, %v337
  %v339 = vpop.f32.mrb[0].mxu0
  %v340 = vadd.f32 %v150, %v339
  %v341 = vpop.f32.mrb[0].mxu0
  %v342 = vadd.f32 %v146, %v341
  %v343 = vpop.f32.mrb[0].mxu0
  %v344 = vadd.f32 %v150, %v343
  %345 = vdwg.mxu0
  %v346 = vpack.c.bf16 %v272, %v268
  %v347 = vpack.c.bf16 %v274, %v270
  %v348 = vpack.c.bf16 %v282, %v278
  %v349 = vpack.c.bf16 %v284, %v280
  %v350 = vpack.c.bf16 %v292, %v288
  %v351 = vpack.c.bf16 %v294, %v290
  %v352 = vpack.c.bf16 %v302, %v298
  %v353 = vpack.c.bf16 %v304, %v300
  %v354 = vpack.c.bf16 %v312, %v308
  %v355 = vpack.c.bf16 %v314, %v310
  %v356 = vpack.c.bf16 %v322, %v318
  %v357 = vpack.c.bf16 %v324, %v320
  %v358 = vpack.c.bf16 %v332, %v328
  %v359 = vpack.c.bf16 %v334, %v330
  %v360 = vpack.c.bf16 %v342, %v338
  %v361 = vpack.c.bf16 %v344, %v340
  %v362 = vmin.bf16 %v346, 0
  %v363 = vmin.bf16 %v347, 0
  %v364 = vmin.bf16 %v348, 0
  %v365 = vmin.bf16 %v349, 0
  %v366 = vmin.bf16 %v350, 0
  %v367 = vmin.bf16 %v351, 0
  %v368 = vmin.bf16 %v352, 0
  %v369 = vmin.bf16 %v353, 0
  %v370 = vmin.bf16 %v354, 0
  %v371 = vmin.bf16 %v355, 0
  %v372 = vmin.bf16 %v356, 0
  %v373 = vmin.bf16 %v357, 0
  %v374 = vmin.bf16 %v358, 0
  %v375 = vmin.bf16 %v359, 0
  %v376 = vmin.bf16 %v360, 0
  %v377 = vmin.bf16 %v361, 0
  %v379 = vmul.bf16 %v362, 1069105081
  %v380 = vpow.bf16.pop %v379
  %v382 = vmul.bf16 %v363, 1069105081
  %v383 = vpow.bf16.pop %v382
  %v385 = vmul.bf16 %v364, 1069105081
  %v386 = vpow.bf16.pop %v385
  %v388 = vmul.bf16 %v365, 1069105081
  %v389 = vpow.bf16.pop %v388
  %v391 = vmul.bf16 %v366, 1069105081
  %v392 = vpow.bf16.pop %v391
  %v394 = vmul.bf16 %v367, 1069105081
  %v395 = vpow.bf16.pop %v394
  %v397 = vmul.bf16 %v368, 1069105081
  %v398 = vpow.bf16.pop %v397
  %v400 = vmul.bf16 %v369, 1069105081
  %v401 = vpow.bf16.pop %v400
  %v403 = vmul.bf16 %v370, 1069105081
  %v404 = vpow.bf16.pop %v403
  %v406 = vmul.bf16 %v371, 1069105081
  %v407 = vpow.bf16.pop %v406
  %v409 = vmul.bf16 %v372, 1069105081
  %v410 = vpow.bf16.pop %v409
  %v412 = vmul.bf16 %v373, 1069105081
  %v413 = vpow.bf16.pop %v412
  %v415 = vmul.bf16 %v374, 1069105081
  %v416 = vpow.bf16.pop %v415
  %v418 = vmul.bf16 %v375, 1069105081
  %v419 = vpow.bf16.pop %v418
  %v421 = vmul.bf16 %v376, 1069105081
  %v422 = vpow.bf16.pop %v421
  %v424 = vmul.bf16 %v377, 1069105081
  %v425 = vpow.bf16.pop %v424
  %v426 = vsub.bf16 %v380, 1065369472
  %v427 = vsub.bf16 %v383, 1065369472
  %v428 = vsub.bf16 %v386, 1065369472
  %v429 = vsub.bf16 %v389, 1065369472
  %v430 = vsub.bf16 %v392, 1065369472
  %v431 = vsub.bf16 %v395, 1065369472
  %v432 = vsub.bf16 %v398, 1065369472
  %v433 = vsub.bf16 %v401, 1065369472
  %v434 = vsub.bf16 %v404, 1065369472
  %v435 = vsub.bf16 %v407, 1065369472
  %v436 = vsub.bf16 %v410, 1065369472
  %v437 = vsub.bf16 %v413, 1065369472
  %v438 = vsub.bf16 %v416, 1065369472
  %v439 = vsub.bf16 %v419, 1065369472
  %v440 = vsub.bf16 %v422, 1065369472
  %v441 = vsub.bf16 %v425, 1065369472
  %v442 = vmul.bf16 %v426, 1071005654
  %v443 = vmul.bf16 %v427, 1071005654
  %v444 = vmul.bf16 %v428, 1071005654
  %v445 = vmul.bf16 %v429, 1071005654
  %v446 = vmul.bf16 %v430, 1071005654
  %v447 = vmul.bf16 %v431, 1071005654
  %v448 = vmul.bf16 %v432, 1071005654
  %v449 = vmul.bf16 %v433, 1071005654
  %v450 = vmul.bf16 %v434, 1071005654
  %v451 = vmul.bf16 %v435, 1071005654
  %v452 = vmul.bf16 %v436, 1071005654
  %v453 = vmul.bf16 %v437, 1071005654
  %v454 = vmul.bf16 %v438, 1071005654
  %v455 = vmul.bf16 %v439, 1071005654
  %v456 = vmul.bf16 %v440, 1071005654
  %v457 = vmul.bf16 %v441, 1071005654
  %vm458 = vcmp.gt.bf16.partialorder %v346, 0
  %vm459 = vcmp.gt.bf16.partialorder %v347, 0
  %vm460 = vcmp.gt.bf16.partialorder %v348, 0
  %vm461 = vcmp.gt.bf16.partialorder %v349, 0
  %vm462 = vcmp.gt.bf16.partialorder %v350, 0
  %vm463 = vcmp.gt.bf16.partialorder %v351, 0
  %vm464 = vcmp.gt.bf16.partialorder %v352, 0
  %vm465 = vcmp.gt.bf16.partialorder %v353, 0
  %vm466 = vcmp.gt.bf16.partialorder %v354, 0
  %vm467 = vcmp.gt.bf16.partialorder %v355, 0
  %vm468 = vcmp.gt.bf16.partialorder %v356, 0
  %vm469 = vcmp.gt.bf16.partialorder %v357, 0
  %vm470 = vcmp.gt.bf16.partialorder %v358, 0
  %vm471 = vcmp.gt.bf16.partialorder %v359, 0
  %vm472 = vcmp.gt.bf16.partialorder %v360, 0
  %vm473 = vcmp.gt.bf16.partialorder %v361, 0
  %v474 = vsel %vm458, %v346, %v442
  %v475 = vsel %vm459, %v347, %v443
  %v476 = vsel %vm460, %v348, %v444
  %v477 = vsel %vm461, %v349, %v445
  %v478 = vsel %vm462, %v350, %v446
  %v479 = vsel %vm463, %v351, %v447
  %v480 = vsel %vm464, %v352, %v448
  %v481 = vsel %vm465, %v353, %v449
  %v482 = vsel %vm466, %v354, %v450
  %v483 = vsel %vm467, %v355, %v451
  %v484 = vsel %vm468, %v356, %v452
  %v485 = vsel %vm469, %v357, %v453
  %v486 = vsel %vm470, %v358, %v454
  %v487 = vsel %vm471, %v359, %v455
  %v488 = vsel %vm472, %v360, %v456
  %v489 = vsel %vm473, %v361, %v457
  %v490 = vmul.bf16 %v474, 1065762694
  %v491 = vmul.bf16 %v475, 1065762694
  %v492 = vmul.bf16 %v476, 1065762694
  %v493 = vmul.bf16 %v477, 1065762694
  %v494 = vmul.bf16 %v478, 1065762694
  %v495 = vmul.bf16 %v479, 1065762694
  %v496 = vmul.bf16 %v480, 1065762694
  %v497 = vmul.bf16 %v481, 1065762694
  %v498 = vmul.bf16 %v482, 1065762694
  %v499 = vmul.bf16 %v483, 1065762694
  %v500 = vmul.bf16 %v484, 1065762694
  %v501 = vmul.bf16 %v485, 1065762694
  %v502 = vmul.bf16 %v486, 1065762694
  %v503 = vmul.bf16 %v487, 1065762694
  %v504 = vmul.bf16 %v488, 1065762694
  %v505 = vmul.bf16 %v489, 1065762694
  %v506 = vld [vmem:[%s3] sm:$0xff]
  %v507 = vld [vmem:[%s3 + $0x8] sm:$0xff]
  %v508 = vld [vmem:[%s3 + $0x10] sm:$0xff]
  %v509 = vld [vmem:[%s3 + $0x18] sm:$0xff]
  %v510 = vld [vmem:[%s3 + $0x20] sm:$0xff]
  %v511 = vld [vmem:[%s3 + $0x28] sm:$0xff]
  %v512 = vld [vmem:[%s3 + $0x30] sm:$0xff]
  %v513 = vld [vmem:[%s3 + $0x38] sm:$0xff]
  %v514 = vld [vmem:[%s3 + $0x40] sm:$0xff]
  %v515 = vld [vmem:[%s3 + $0x48] sm:$0xff]
  %v516 = vld [vmem:[%s3 + $0x50] sm:$0xff]
  %v517 = vld [vmem:[%s3 + $0x58] sm:$0xff]
  %v518 = vld [vmem:[%s3 + $0x60] sm:$0xff]
  %v519 = vld [vmem:[%s3 + $0x68] sm:$0xff]
  %v520 = vld [vmem:[%s3 + $0x70] sm:$0xff]
  %v521 = vld [vmem:[%s3 + $0x78] sm:$0xff]
  %v522 = vld [vmem:[%s3 + $0x80] sm:$0xff]
  %v523 = vld [vmem:[%s3 + $0x88] sm:$0xff]
  %v524 = vld [vmem:[%s3 + $0x90] sm:$0xff]
  %v525 = vld [vmem:[%s3 + $0x98] sm:$0xff]
  %v526 = vld [vmem:[%s3 + $0xa0] sm:$0xff]
  %v527 = vld [vmem:[%s3 + $0xa8] sm:$0xff]
  %v528 = vld [vmem:[%s3 + $0xb0] sm:$0xff]
  %v529 = vld [vmem:[%s3 + $0xb8] sm:$0xff]
  %v530 = vld [vmem:[%s3 + $0xc0] sm:$0xff]
  %v531 = vld [vmem:[%s3 + $0xc8] sm:$0xff]
  %v532 = vld [vmem:[%s3 + $0xd0] sm:$0xff]
  %v533 = vld [vmem:[%s3 + $0xd8] sm:$0xff]
  %v534 = vld [vmem:[%s3 + $0xe0] sm:$0xff]
  %v535 = vld [vmem:[%s3 + $0xe8] sm:$0xff]
  %v536 = vld [vmem:[%s3 + $0xf0] sm:$0xff]
  %v537 = vld [vmem:[%s3 + $0xf8] sm:$0xff]
  %v538 = vld [vmem:[%s4] sm:$0x3]
  %v540 = vlaneseq
  %v541 = vshrl.u32 %v540, 7
  %v542 = vsub.s32 0, %v541
  %v543 = vrot.slane %v538, %v542
  %v544 = vlaneseq
  %v545 = vshrl.u32 %v544, 7
  %v546 = vsub.s32 1, %v545
  %v547 = vrot.slane %v538, %v546
  %v582 = vunpack.c.l.b16 %v506
  %v583 = vunpack.c.h.b16 %v506
  %v584 = vunpack.c.l.b16 %v507
  %v585 = vunpack.c.h.b16 %v507
  %v586 = vunpack.c.l.b16 %v508
  %v587 = vunpack.c.h.b16 %v508
  %v588 = vunpack.c.l.b16 %v509
  %v589 = vunpack.c.h.b16 %v509
  %v590 = vunpack.c.l.b16 %v510
  %v591 = vunpack.c.h.b16 %v510
  %v592 = vunpack.c.l.b16 %v511
  %v593 = vunpack.c.h.b16 %v511
  %v594 = vunpack.c.l.b16 %v512
  %v595 = vunpack.c.h.b16 %v512
  %v596 = vunpack.c.l.b16 %v513
  %v597 = vunpack.c.h.b16 %v513
  %v598 = vunpack.c.l.b16 %v514
  %v599 = vunpack.c.h.b16 %v514
  %v600 = vunpack.c.l.b16 %v515
  %v601 = vunpack.c.h.b16 %v515
  %v602 = vunpack.c.l.b16 %v516
  %v603 = vunpack.c.h.b16 %v516
  %v604 = vunpack.c.l.b16 %v517
  %v605 = vunpack.c.h.b16 %v517
  %v606 = vunpack.c.l.b16 %v518
  %v607 = vunpack.c.h.b16 %v518
  %v608 = vunpack.c.l.b16 %v519
  %v609 = vunpack.c.h.b16 %v519
  %v610 = vunpack.c.l.b16 %v520
  %v611 = vunpack.c.h.b16 %v520
  %v612 = vunpack.c.l.b16 %v521
  %v613 = vunpack.c.h.b16 %v521
  %v614 = vunpack.c.l.b16 %v522
  %v615 = vunpack.c.h.b16 %v522
  %v616 = vunpack.c.l.b16 %v523
  %v617 = vunpack.c.h.b16 %v523
  %v618 = vunpack.c.l.b16 %v524
  %v619 = vunpack.c.h.b16 %v524
  %v620 = vunpack.c.l.b16 %v525
  %v621 = vunpack.c.h.b16 %v525
  %v622 = vunpack.c.l.b16 %v526
  %v623 = vunpack.c.h.b16 %v526
  %v624 = vunpack.c.l.b16 %v527
  %v625 = vunpack.c.h.b16 %v527
  %v626 = vunpack.c.l.b16 %v528
  %v627 = vunpack.c.h.b16 %v528
  %v628 = vunpack.c.l.b16 %v529
  %v629 = vunpack.c.h.b16 %v529
  %v630 = vunpack.c.l.b16 %v530
  %v631 = vunpack.c.h.b16 %v530
  %v632 = vunpack.c.l.b16 %v531
  %v633 = vunpack.c.h.b16 %v531
  %v634 = vunpack.c.l.b16 %v532
  %v635 = vunpack.c.h.b16 %v532
  %v636 = vunpack.c.l.b16 %v533
  %v637 = vunpack.c.h.b16 %v533
  %v638 = vunpack.c.l.b16 %v534
  %v639 = vunpack.c.h.b16 %v534
  %v640 = vunpack.c.l.b16 %v535
  %v641 = vunpack.c.h.b16 %v535
  %v642 = vunpack.c.l.b16 %v536
  %v643 = vunpack.c.h.b16 %v536
  %v644 = vunpack.c.l.b16 %v537
  %v645 = vunpack.c.h.b16 %v537
  %v646 = vpack.c.b16 %v584, %v582
  %v647 = vpack.c.b16 %v585, %v583
  %v648 = vpack.c.b16 %v588, %v586
  %v649 = vpack.c.b16 %v589, %v587
  %v650 = vpack.c.b16 %v592, %v590
  %v651 = vpack.c.b16 %v593, %v591
  %v652 = vpack.c.b16 %v596, %v594
  %v653 = vpack.c.b16 %v597, %v595
  %v654 = vpack.c.b16 %v600, %v598
  %v655 = vpack.c.b16 %v601, %v599
  %v656 = vpack.c.b16 %v604, %v602
  %v657 = vpack.c.b16 %v605, %v603
  %v658 = vpack.c.b16 %v608, %v606
  %v659 = vpack.c.b16 %v609, %v607
  %v660 = vpack.c.b16 %v612, %v610
  %v661 = vpack.c.b16 %v613, %v611
  %v662 = vpack.c.b16 %v616, %v614
  %v663 = vpack.c.b16 %v617, %v615
  %v664 = vpack.c.b16 %v620, %v618
  %v665 = vpack.c.b16 %v621, %v619
  %v666 = vpack.c.b16 %v624, %v622
  %v667 = vpack.c.b16 %v625, %v623
  %v668 = vpack.c.b16 %v628, %v626
  %v669 = vpack.c.b16 %v629, %v627
  %v670 = vpack.c.b16 %v632, %v630
  %v671 = vpack.c.b16 %v633, %v631
  %v672 = vpack.c.b16 %v636, %v634
  %v673 = vpack.c.b16 %v637, %v635
  %v674 = vpack.c.b16 %v640, %v638
  %v675 = vpack.c.b16 %v641, %v639
  %v676 = vpack.c.b16 %v644, %v642
  %v677 = vpack.c.b16 %v645, %v643
  %710 = vmatprep.subr.bf16.mxu0 %v647
  %711 = vmatpush1.bf16.msra.mxu0 %v646
  %712 = vmatprep.subr.bf16.mxu0 %v649
  %713 = vmatpush1.bf16.msra.mxu0 %v648
  %714 = vmatprep.subr.bf16.mxu0 %v651
  %715 = vmatpush1.bf16.msra.mxu0 %v650
  %716 = vmatprep.subr.bf16.mxu0 %v653
  %717 = vmatpush1.bf16.msra.mxu0 %v652
  %718 = vmatprep.subr.bf16.mxu0 %v655
  %719 = vmatpush1.bf16.msra.mxu0 %v654
  %720 = vmatprep.subr.bf16.mxu0 %v657
  %721 = vmatpush1.bf16.msra.mxu0 %v656
  %722 = vmatprep.subr.bf16.mxu0 %v659
  %723 = vmatpush1.bf16.msra.mxu0 %v658
  %724 = vmatprep.subr.bf16.mxu0 %v661
  %725 = vmatpush1.bf16.msra.mxu0 %v660
  %726 = vmatprep.subr.bf16.mxu0 %v663
  %727 = vmatpush1.bf16.msra.mxu0 %v662
  %728 = vmatprep.subr.bf16.mxu0 %v665
  %729 = vmatpush1.bf16.msra.mxu0 %v664
  %730 = vmatprep.subr.bf16.mxu0 %v667
  %731 = vmatpush1.bf16.msra.mxu0 %v666
  %732 = vmatprep.subr.bf16.mxu0 %v669
  %733 = vmatpush1.bf16.msra.mxu0 %v668
  %734 = vmatprep.subr.bf16.mxu0 %v671
  %735 = vmatpush1.bf16.msra.mxu0 %v670
  %736 = vmatprep.subr.bf16.mxu0 %v673
  %737 = vmatpush1.bf16.msra.mxu0 %v672
  %738 = vmatprep.subr.bf16.mxu0 %v675
  %739 = vmatpush1.bf16.msra.mxu0 %v674
  %740 = vmatprep.subr.bf16.mxu0 %v677
  %741 = vmatpush1.bf16.msra.mxu0 %v676
  %742 = vmatprep.mubr.bf16.mxu0 %v491
  %743 = vmatmul.mubr.bf16.gmra.mrb[0].mxu0 %v490
  %v744 = vpop.f32.mrb[0].mxu0
  %v745 = vadd.f32 %v543, %v744
  %v746 = vpop.f32.mrb[0].mxu0
  %v747 = vadd.f32 %v547, %v746
  %v748 = vpop.f32.mrb[0].mxu0
  %v749 = vadd.f32 %v543, %v748
  %v750 = vpop.f32.mrb[0].mxu0
  %v751 = vadd.f32 %v547, %v750
  %752 = vmatprep.mubr.bf16.mxu0 %v493
  %753 = vmatmul.mubr.bf16.gmra.mrb[0].mxu0 %v492
  %v754 = vpop.f32.mrb[0].mxu0
  %v755 = vadd.f32 %v543, %v754
  %v756 = vpop.f32.mrb[0].mxu0
  %v757 = vadd.f32 %v547, %v756
  %v758 = vpop.f32.mrb[0].mxu0
  %v759 = vadd.f32 %v543, %v758
  %v760 = vpop.f32.mrb[0].mxu0
  %v761 = vadd.f32 %v547, %v760
  %762 = vmatprep.mubr.bf16.mxu0 %v495
  %763 = vmatmul.mubr.bf16.gmra.mrb[0].mxu0 %v494
  %v764 = vpop.f32.mrb[0].mxu0
  %v765 = vadd.f32 %v543, %v764
  %v766 = vpop.f32.mrb[0].mxu0
  %v767 = vadd.f32 %v547, %v766
  %v768 = vpop.f32.mrb[0].mxu0
  %v769 = vadd.f32 %v543, %v768
  %v770 = vpop.f32.mrb[0].mxu0
  %v771 = vadd.f32 %v547, %v770
  %772 = vmatprep.mubr.bf16.mxu0 %v497
  %773 = vmatmul.mubr.bf16.gmra.mrb[0].mxu0 %v496
  %v774 = vpop.f32.mrb[0].mxu0
  %v775 = vadd.f32 %v543, %v774
  %v776 = vpop.f32.mrb[0].mxu0
  %v777 = vadd.f32 %v547, %v776
  %v778 = vpop.f32.mrb[0].mxu0
  %v779 = vadd.f32 %v543, %v778
  %v780 = vpop.f32.mrb[0].mxu0
  %v781 = vadd.f32 %v547, %v780
  %782 = vmatprep.mubr.bf16.mxu0 %v499
  %783 = vmatmul.mubr.bf16.gmra.mrb[0].mxu0 %v498
  %v784 = vpop.f32.mrb[0].mxu0
  %v785 = vadd.f32 %v543, %v784
  %v786 = vpop.f32.mrb[0].mxu0
  %v787 = vadd.f32 %v547, %v786
  %v788 = vpop.f32.mrb[0].mxu0
  %v789 = vadd.f32 %v543, %v788
  %v790 = vpop.f32.mrb[0].mxu0
  %v791 = vadd.f32 %v547, %v790
  %792 = vmatprep.mubr.bf16.mxu0 %v501
  %793 = vmatmul.mubr.bf16.gmra.mrb[0].mxu0 %v500
  %v794 = vpop.f32.mrb[0].mxu0
  %v795 = vadd.f32 %v543, %v794
  %v796 = vpop.f32.mrb[0].mxu0
  %v797 = vadd.f32 %v547, %v796
  %v798 = vpop.f32.mrb[0].mxu0
  %v799 = vadd.f32 %v543, %v798
  %v800 = vpop.f32.mrb[0].mxu0
  %v801 = vadd.f32 %v547, %v800
  %802 = vmatprep.mubr.bf16.mxu0 %v503
  %803 = vmatmul.mubr.bf16.gmra.mrb[0].mxu0 %v502
  %v804 = vpop.f32.mrb[0].mxu0
  %v805 = vadd.f32 %v543, %v804
  %v806 = vpop.f32.mrb[0].mxu0
  %v807 = vadd.f32 %v547, %v806
  %v808 = vpop.f32.mrb[0].mxu0
  %v809 = vadd.f32 %v543, %v808
  %v810 = vpop.f32.mrb[0].mxu0
  %v811 = vadd.f32 %v547, %v810
  %812 = vmatprep.mubr.bf16.mxu0 %v505
  %813 = vmatmul.mubr.bf16.gmra.mrb[0].mxu0 %v504
  %v814 = vpop.f32.mrb[0].mxu0
  %v815 = vadd.f32 %v543, %v814
  %v816 = vpop.f32.mrb[0].mxu0
  %v817 = vadd.f32 %v547, %v816
  %v818 = vpop.f32.mrb[0].mxu0
  %v819 = vadd.f32 %v543, %v818
  %v820 = vpop.f32.mrb[0].mxu0
  %v821 = vadd.f32 %v547, %v820
  %822 = vdwg.mxu0
  %v823 = vpack.c.bf16 %v749, %v745
  %v824 = vpack.c.bf16 %v751, %v747
  %v825 = vpack.c.bf16 %v759, %v755
  %v826 = vpack.c.bf16 %v761, %v757
  %v827 = vpack.c.bf16 %v769, %v765
  %v828 = vpack.c.bf16 %v771, %v767
  %v829 = vpack.c.bf16 %v779, %v775
  %v830 = vpack.c.bf16 %v781, %v777
  %v831 = vpack.c.bf16 %v789, %v785
  %v832 = vpack.c.bf16 %v791, %v787
  %v833 = vpack.c.bf16 %v799, %v795
  %v834 = vpack.c.bf16 %v801, %v797
  %v835 = vpack.c.bf16 %v809, %v805
  %v836 = vpack.c.bf16 %v811, %v807
  %v837 = vpack.c.bf16 %v819, %v815
  %v838 = vpack.c.bf16 %v821, %v817
  %v839 = vmin.bf16 %v823, 0
  %v840 = vmin.bf16 %v824, 0
  %v841 = vmin.bf16 %v825, 0
  %v842 = vmin.bf16 %v826, 0
  %v843 = vmin.bf16 %v827, 0
  %v844 = vmin.bf16 %v828, 0
  %v845 = vmin.bf16 %v829, 0
  %v846 = vmin.bf16 %v830, 0
  %v847 = vmin.bf16 %v831, 0
  %v848 = vmin.bf16 %v832, 0
  %v849 = vmin.bf16 %v833, 0
  %v850 = vmin.bf16 %v834, 0
  %v851 = vmin.bf16 %v835, 0
  %v852 = vmin.bf16 %v836, 0
  %v853 = vmin.bf16 %v837, 0
  %v854 = vmin.bf16 %v838, 0
  %v856 = vmul.bf16 %v839, 1069105081
  %v857 = vpow.bf16.pop %v856
  %v859 = vmul.bf16 %v840, 1069105081
  %v860 = vpow.bf16.pop %v859
  %v862 = vmul.bf16 %v841, 1069105081
  %v863 = vpow.bf16.pop %v862
  %v865 = vmul.bf16 %v842, 1069105081
  %v866 = vpow.bf16.pop %v865
  %v868 = vmul.bf16 %v843, 1069105081
  %v869 = vpow.bf16.pop %v868
  %v871 = vmul.bf16 %v844, 1069105081
  %v872 = vpow.bf16.pop %v871
  %v874 = vmul.bf16 %v845, 1069105081
  %v875 = vpow.bf16.pop %v874
  %v877 = vmul.bf16 %v846, 1069105081
  %v878 = vpow.bf16.pop %v877
  %v880 = vmul.bf16 %v847, 1069105081
  %v881 = vpow.bf16.pop %v880
  %v883 = vmul.bf16 %v848, 1069105081
  %v884 = vpow.bf16.pop %v883
  %v886 = vmul.bf16 %v849, 1069105081
  %v887 = vpow.bf16.pop %v886
  %v889 = vmul.bf16 %v850, 1069105081
  %v890 = vpow.bf16.pop %v889
  %v892 = vmul.bf16 %v851, 1069105081
  %v893 = vpow.bf16.pop %v892
  %v895 = vmul.bf16 %v852, 1069105081
  %v896 = vpow.bf16.pop %v895
  %v898 = vmul.bf16 %v853, 1069105081
  %v899 = vpow.bf16.pop %v898
  %v901 = vmul.bf16 %v854, 1069105081
  %v902 = vpow.bf16.pop %v901
  %v903 = vsub.bf16 %v857, 1065369472
  %v904 = vsub.bf16 %v860, 1065369472
  %v905 = vsub.bf16 %v863, 1065369472
  %v906 = vsub.bf16 %v866, 1065369472
  %v907 = vsub.bf16 %v869, 1065369472
  %v908 = vsub.bf16 %v872, 1065369472
  %v909 = vsub.bf16 %v875, 1065369472
  %v910 = vsub.bf16 %v878, 1065369472
  %v911 = vsub.bf16 %v881, 1065369472
  %v912 = vsub.bf16 %v884, 1065369472
  %v913 = vsub.bf16 %v887, 1065369472
  %v914 = vsub.bf16 %v890, 1065369472
  %v915 = vsub.bf16 %v893, 1065369472
  %v916 = vsub.bf16 %v896, 1065369472
  %v917 = vsub.bf16 %v899, 1065369472
  %v918 = vsub.bf16 %v902, 1065369472
  %v919 = vmul.bf16 %v903, 1071005654
  %v920 = vmul.bf16 %v904, 1071005654
  %v921 = vmul.bf16 %v905, 1071005654
  %v922 = vmul.bf16 %v906, 1071005654
  %v923 = vmul.bf16 %v907, 1071005654
  %v924 = vmul.bf16 %v908, 1071005654
  %v925 = vmul.bf16 %v909, 1071005654
  %v926 = vmul.bf16 %v910, 1071005654
  %v927 = vmul.bf16 %v911, 1071005654
  %v928 = vmul.bf16 %v912, 1071005654
  %v929 = vmul.bf16 %v913, 1071005654
  %v930 = vmul.bf16 %v914, 1071005654
  %v931 = vmul.bf16 %v915, 1071005654
  %v932 = vmul.bf16 %v916, 1071005654
  %v933 = vmul.bf16 %v917, 1071005654
  %v934 = vmul.bf16 %v918, 1071005654
  %vm935 = vcmp.gt.bf16.partialorder %v823, 0
  %vm936 = vcmp.gt.bf16.partialorder %v824, 0
  %vm937 = vcmp.gt.bf16.partialorder %v825, 0
  %vm938 = vcmp.gt.bf16.partialorder %v826, 0
  %vm939 = vcmp.gt.bf16.partialorder %v827, 0
  %vm940 = vcmp.gt.bf16.partialorder %v828, 0
  %vm941 = vcmp.gt.bf16.partialorder %v829, 0
  %vm942 = vcmp.gt.bf16.partialorder %v830, 0
  %vm943 = vcmp.gt.bf16.partialorder %v831, 0
  %vm944 = vcmp.gt.bf16.partialorder %v832, 0
  %vm945 = vcmp.gt.bf16.partialorder %v833, 0
  %vm946 = vcmp.gt.bf16.partialorder %v834, 0
  %vm947 = vcmp.gt.bf16.partialorder %v835, 0
  %vm948 = vcmp.gt.bf16.partialorder %v836, 0
  %vm949 = vcmp.gt.bf16.partialorder %v837, 0
  %vm950 = vcmp.gt.bf16.partialorder %v838, 0
  %v951 = vsel %vm935, %v823, %v919
  %v952 = vsel %vm936, %v824, %v920
  %v953 = vsel %vm937, %v825, %v921
  %v954 = vsel %vm938, %v826, %v922
  %v955 = vsel %vm939, %v827, %v923
  %v956 = vsel %vm940, %v828, %v924
  %v957 = vsel %vm941, %v829, %v925
  %v958 = vsel %vm942, %v830, %v926
  %v959 = vsel %vm943, %v831, %v927
  %v960 = vsel %vm944, %v832, %v928
  %v961 = vsel %vm945, %v833, %v929
  %v962 = vsel %vm946, %v834, %v930
  %v963 = vsel %vm947, %v835, %v931
  %v964 = vsel %vm948, %v836, %v932
  %v965 = vsel %vm949, %v837, %v933
  %v966 = vsel %vm950, %v838, %v934
  %v967 = vmul.bf16 %v951, 1065762694
  %v968 = vmul.bf16 %v952, 1065762694
  %v969 = vmul.bf16 %v953, 1065762694
  %v970 = vmul.bf16 %v954, 1065762694
  %v971 = vmul.bf16 %v955, 1065762694
  %v972 = vmul.bf16 %v956, 1065762694
  %v973 = vmul.bf16 %v957, 1065762694
  %v974 = vmul.bf16 %v958, 1065762694
  %v975 = vmul.bf16 %v959, 1065762694
  %v976 = vmul.bf16 %v960, 1065762694
  %v977 = vmul.bf16 %v961, 1065762694
  %v978 = vmul.bf16 %v962, 1065762694
  %v979 = vmul.bf16 %v963, 1065762694
  %v980 = vmul.bf16 %v964, 1065762694
  %v981 = vmul.bf16 %v965, 1065762694
  %v982 = vmul.bf16 %v966, 1065762694
  %v983 = vld [vmem:[%s5] sm:$0xff]
  %v984 = vld [vmem:[%s5 + $0x8] sm:$0xff]
  %v985 = vld [vmem:[%s5 + $0x10] sm:$0xff]
  %v986 = vld [vmem:[%s5 + $0x18] sm:$0xff]
  %v987 = vld [vmem:[%s5 + $0x20] sm:$0xff]
  %v988 = vld [vmem:[%s5 + $0x28] sm:$0xff]
  %v989 = vld [vmem:[%s5 + $0x30] sm:$0xff]
  %v990 = vld [vmem:[%s5 + $0x38] sm:$0xff]
  %v991 = vld [vmem:[%s5 + $0x40] sm:$0xff]
  %v992 = vld [vmem:[%s5 + $0x48] sm:$0xff]
  %v993 = vld [vmem:[%s5 + $0x50] sm:$0xff]
  %v994 = vld [vmem:[%s5 + $0x58] sm:$0xff]
  %v995 = vld [vmem:[%s5 + $0x60] sm:$0xff]
  %v996 = vld [vmem:[%s5 + $0x68] sm:$0xff]
  %v997 = vld [vmem:[%s5 + $0x70] sm:$0xff]
  %v998 = vld [vmem:[%s5 + $0x78] sm:$0xff]
  %v999 = vld [vmem:[%s5 + $0x80] sm:$0xff]
  %v1000 = vld [vmem:[%s5 + $0x88] sm:$0xff]
  %v1001 = vld [vmem:[%s5 + $0x90] sm:$0xff]
  %v1002 = vld [vmem:[%s5 + $0x98] sm:$0xff]
  %v1003 = vld [vmem:[%s5 + $0xa0] sm:$0xff]
  %v1004 = vld [vmem:[%s5 + $0xa8] sm:$0xff]
  %v1005 = vld [vmem:[%s5 + $0xb0] sm:$0xff]
  %v1006 = vld [vmem:[%s5 + $0xb8] sm:$0xff]
  %v1007 = vld [vmem:[%s5 + $0xc0] sm:$0xff]
  %v1008 = vld [vmem:[%s5 + $0xc8] sm:$0xff]
  %v1009 = vld [vmem:[%s5 + $0xd0] sm:$0xff]
  %v1010 = vld [vmem:[%s5 + $0xd8] sm:$0xff]
  %v1011 = vld [vmem:[%s5 + $0xe0] sm:$0xff]
  %v1012 = vld [vmem:[%s5 + $0xe8] sm:$0xff]
  %v1013 = vld [vmem:[%s5 + $0xf0] sm:$0xff]
  %v1014 = vld [vmem:[%s5 + $0xf8] sm:$0xff]
  %v1015 = vld [vmem:[%s6] sm:$0x3]
  %v1017 = vlaneseq
  %v1018 = vshrl.u32 %v1017, 7
  %v1019 = vsub.s32 0, %v1018
  %v1020 = vrot.slane %v1015, %v1019
  %v1021 = vlaneseq
  %v1022 = vshrl.u32 %v1021, 7
  %v1023 = vsub.s32 1, %v1022
  %v1024 = vrot.slane %v1015, %v1023
  %v1059 = vunpack.c.l.b16 %v983
  %v1060 = vunpack.c.h.b16 %v983
  %v1061 = vunpack.c.l.b16 %v984
  %v1062 = vunpack.c.h.b16 %v984
  %v1063 = vunpack.c.l.b16 %v985
  %v1064 = vunpack.c.h.b16 %v985
  %v1065 = vunpack.c.l.b16 %v986
  %v1066 = vunpack.c.h.b16 %v986
  %v1067 = vunpack.c.l.b16 %v987
  %v1068 = vunpack.c.h.b16 %v987
  %v1069 = vunpack.c.l.b16 %v988
  %v1070 = vunpack.c.h.b16 %v988
  %v1071 = vunpack.c.l.b16 %v989
  %v1072 = vunpack.c.h.b16 %v989
  %v1073 = vunpack.c.l.b16 %v990
  %v1074 = vunpack.c.h.b16 %v990
  %v1075 = vunpack.c.l.b16 %v991
  %v1076 = vunpack.c.h.b16 %v991
  %v1077 = vunpack.c.l.b16 %v992
  %v1078 = vunpack.c.h.b16 %v992
  %v1079 = vunpack.c.l.b16 %v993
  %v1080 = vunpack.c.h.b16 %v993
  %v1081 = vunpack.c.l.b16 %v994
  %v1082 = vunpack.c.h.b16 %v994
  %v1083 = vunpack.c.l.b16 %v995
  %v1084 = vunpack.c.h.b16 %v995
  %v1085 = vunpack.c.l.b16 %v996
  %v1086 = vunpack.c.h.b16 %v996
  %v1087 = vunpack.c.l.b16 %v997
  %v1088 = vunpack.c.h.b16 %v997
  %v1089 = vunpack.c.l.b16 %v998
  %v1090 = vunpack.c.h.b16 %v998
  %v1091 = vunpack.c.l.b16 %v999
  %v1092 = vunpack.c.h.b16 %v999
  %v1093 = vunpack.c.l.b16 %v1000
  %v1094 = vunpack.c.h.b16 %v1000
  %v1095 = vunpack.c.l.b16 %v1001
  %v1096 = vunpack.c.h.b16 %v1001
  %v1097 = vunpack.c.l.b16 %v1002
  %v1098 = vunpack.c.h.b16 %v1002
  %v1099 = vunpack.c.l.b16 %v1003
  %v1100 = vunpack.c.h.b16 %v1003
  %v1101 = vunpack.c.l.b16 %v1004
  %v1102 = vunpack.c.h.b16 %v1004
  %v1103 = vunpack.c.l.b16 %v1005
  %v1104 = vunpack.c.h.b16 %v1005
  %v1105 = vunpack.c.l.b16 %v1006
  %v1106 = vunpack.c.h.b16 %v1006
  %v1107 = vunpack.c.l.b16 %v1007
  %v1108 = vunpack.c.h.b16 %v1007
  %v1109 = vunpack.c.l.b16 %v1008
  %v1110 = vunpack.c.h.b16 %v1008
  %v1111 = vunpack.c.l.b16 %v1009
  %v1112 = vunpack.c.h.b16 %v1009
  %v1113 = vunpack.c.l.b16 %v1010
  %v1114 = vunpack.c.h.b16 %v1010
  %v1115 = vunpack.c.l.b16 %v1011
  %v1116 = vunpack.c.h.b16 %v1011
  %v1117 = vunpack.c.l.b16 %v1012
  %v1118 = vunpack.c.h.b16 %v1012
  %v1119 = vunpack.c.l.b16 %v1013
  %v1120 = vunpack.c.h.b16 %v1013
  %v1121 = vunpack.c.l.b16 %v1014
  %v1122 = vunpack.c.h.b16 %v1014
  %v1123 = vpack.c.b16 %v1061, %v1059
  %v1124 = vpack.c.b16 %v1062, %v1060
  %v1125 = vpack.c.b16 %v1065, %v1063
  %v1126 = vpack.c.b16 %v1066, %v1064
  %v1127 = vpack.c.b16 %v1069, %v1067
  %v1128 = vpack.c.b16 %v1070, %v1068
  %v1129 = vpack.c.b16 %v1073, %v1071
  %v1130 = vpack.c.b16 %v1074, %v1072
  %v1131 = vpack.c.b16 %v1077, %v1075
  %v1132 = vpack.c.b16 %v1078, %v1076
  %v1133 = vpack.c.b16 %v1081, %v1079
  %v1134 = vpack.c.b16 %v1082, %v1080
  %v1135 = vpack.c.b16 %v1085, %v1083
  %v1136 = vpack.c.b16 %v1086, %v1084
  %v1137 = vpack.c.b16 %v1089, %v1087
  %v1138 = vpack.c.b16 %v1090, %v1088
  %v1139 = vpack.c.b16 %v1093, %v1091
  %v1140 = vpack.c.b16 %v1094, %v1092
  %v1141 = vpack.c.b16 %v1097, %v1095
  %v1142 = vpack.c.b16 %v1098, %v1096
  %v1143 = vpack.c.b16 %v1101, %v1099
  %v1144 = vpack.c.b16 %v1102, %v1100
  %v1145 = vpack.c.b16 %v1105, %v1103
  %v1146 = vpack.c.b16 %v1106, %v1104
  %v1147 = vpack.c.b16 %v1109, %v1107
  %v1148 = vpack.c.b16 %v1110, %v1108
  %v1149 = vpack.c.b16 %v1113, %v1111
  %v1150 = vpack.c.b16 %v1114, %v1112
  %v1151 = vpack.c.b16 %v1117, %v1115
  %v1152 = vpack.c.b16 %v1118, %v1116
  %v1153 = vpack.c.b16 %v1121, %v1119
  %v1154 = vpack.c.b16 %v1122, %v1120
  %1187 = vmatprep.subr.bf16.mxu0 %v1124
  %1188 = vmatpush1.bf16.msra.mxu0 %v1123
  %1189 = vmatprep.subr.bf16.mxu0 %v1126
  %1190 = vmatpush1.bf16.msra.mxu0 %v1125
  %1191 = vmatprep.subr.bf16.mxu0 %v1128
  %1192 = vmatpush1.bf16.msra.mxu0 %v1127
  %1193 = vmatprep.subr.bf16.mxu0 %v1130
  %1194 = vmatpush1.bf16.msra.mxu0 %v1129
  %1195 = vmatprep.subr.bf16.mxu0 %v1132
  %1196 = vmatpush1.bf16.msra.mxu0 %v1131
  %1197 = vmatprep.subr.bf16.mxu0 %v1134
  %1198 = vmatpush1.bf16.msra.mxu0 %v1133
  %1199 = vmatprep.subr.bf16.mxu0 %v1136
  %1200 = vmatpush1.bf16.msra.mxu0 %v1135
  %1201 = vmatprep.subr.bf16.mxu0 %v1138
  %1202 = vmatpush1.bf16.msra.mxu0 %v1137
  %1203 = vmatprep.subr.bf16.mxu0 %v1140
  %1204 = vmatpush1.bf16.msra.mxu0 %v1139
  %1205 = vmatprep.subr.bf16.mxu0 %v1142
  %1206 = vmatpush1.bf16.msra.mxu0 %v1141
  %1207 = vmatprep.subr.bf16.mxu0 %v1144
  %1208 = vmatpush1.bf16.msra.mxu0 %v1143
  %1209 = vmatprep.subr.bf16.mxu0 %v1146
  %1210 = vmatpush1.bf16.msra.mxu0 %v1145
  %1211 = vmatprep.subr.bf16.mxu0 %v1148
  %1212 = vmatpush1.bf16.msra.mxu0 %v1147
  %1213 = vmatprep.subr.bf16.mxu0 %v1150
  %1214 = vmatpush1.bf16.msra.mxu0 %v1149
  %1215 = vmatprep.subr.bf16.mxu0 %v1152
  %1216 = vmatpush1.bf16.msra.mxu0 %v1151
  %1217 = vmatprep.subr.bf16.mxu0 %v1154
  %1218 = vmatpush1.bf16.msra.mxu0 %v1153
  %1219 = vmatprep.mubr.bf16.mxu0 %v968
  %1220 = vmatmul.mubr.bf16.gmra.mrb[0].mxu0 %v967
  %v1221 = vpop.f32.mrb[0].mxu0
  %v1222 = vadd.f32 %v1020, %v1221
  %v1223 = vpop.f32.mrb[0].mxu0
  %v1224 = vadd.f32 %v1024, %v1223
  %v1225 = vpop.f32.mrb[0].mxu0
  %v1226 = vadd.f32 %v1020, %v1225
  %v1227 = vpop.f32.mrb[0].mxu0
  %v1228 = vadd.f32 %v1024, %v1227
  %1229 = vmatprep.mubr.bf16.mxu0 %v970
  %1230 = vmatmul.mubr.bf16.gmra.mrb[0].mxu0 %v969
  %v1231 = vpop.f32.mrb[0].mxu0
  %v1232 = vadd.f32 %v1020, %v1231
  %v1233 = vpop.f32.mrb[0].mxu0
  %v1234 = vadd.f32 %v1024, %v1233
  %v1235 = vpop.f32.mrb[0].mxu0
  %v1236 = vadd.f32 %v1020, %v1235
  %v1237 = vpop.f32.mrb[0].mxu0
  %v1238 = vadd.f32 %v1024, %v1237
  %1239 = vmatprep.mubr.bf16.mxu0 %v972
  %1240 = vmatmul.mubr.bf16.gmra.mrb[0].mxu0 %v971
  %v1241 = vpop.f32.mrb[0].mxu0
  %v1242 = vadd.f32 %v1020, %v1241
  %v1243 = vpop.f32.mrb[0].mxu0
  %v1244 = vadd.f32 %v1024, %v1243
  %v1245 = vpop.f32.mrb[0].mxu0
  %v1246 = vadd.f32 %v1020, %v1245
  %v1247 = vpop.f32.mrb[0].mxu0
  %v1248 = vadd.f32 %v1024, %v1247
  %1249 = vmatprep.mubr.bf16.mxu0 %v974
  %1250 = vmatmul.mubr.bf16.gmra.mrb[0].mxu0 %v973
  %v1251 = vpop.f32.mrb[0].mxu0
  %v1252 = vadd.f32 %v1020, %v1251
  %v1253 = vpop.f32.mrb[0].mxu0
  %v1254 = vadd.f32 %v1024, %v1253
  %v1255 = vpop.f32.mrb[0].mxu0
  %v1256 = vadd.f32 %v1020, %v1255
  %v1257 = vpop.f32.mrb[0].mxu0
  %v1258 = vadd.f32 %v1024, %v1257
  %1259 = vmatprep.mubr.bf16.mxu0 %v976
  %1260 = vmatmul.mubr.bf16.gmra.mrb[0].mxu0 %v975
  %v1261 = vpop.f32.mrb[0].mxu0
  %v1262 = vadd.f32 %v1020, %v1261
  %v1263 = vpop.f32.mrb[0].mxu0
  %v1264 = vadd.f32 %v1024, %v1263
  %v1265 = vpop.f32.mrb[0].mxu0
  %v1266 = vadd.f32 %v1020, %v1265
  %v1267 = vpop.f32.mrb[0].mxu0
  %v1268 = vadd.f32 %v1024, %v1267
  %1269 = vmatprep.mubr.bf16.mxu0 %v978
  %1270 = vmatmul.mubr.bf16.gmra.mrb[0].mxu0 %v977
  %v1271 = vpop.f32.mrb[0].mxu0
  %v1272 = vadd.f32 %v1020, %v1271
  %v1273 = vpop.f32.mrb[0].mxu0
  %v1274 = vadd.f32 %v1024, %v1273
  %v1275 = vpop.f32.mrb[0].mxu0
  %v1276 = vadd.f32 %v1020, %v1275
  %v1277 = vpop.f32.mrb[0].mxu0
  %v1278 = vadd.f32 %v1024, %v1277
  %1279 = vmatprep.mubr.bf16.mxu0 %v980
  %1280 = vmatmul.mubr.bf16.gmra.mrb[0].mxu0 %v979
  %v1281 = vpop.f32.mrb[0].mxu0
  %v1282 = vadd.f32 %v1020, %v1281
  %v1283 = vpop.f32.mrb[0].mxu0
  %v1284 = vadd.f32 %v1024, %v1283
  %v1285 = vpop.f32.mrb[0].mxu0
  %v1286 = vadd.f32 %v1020, %v1285
  %v1287 = vpop.f32.mrb[0].mxu0
  %v1288 = vadd.f32 %v1024, %v1287
  %1289 = vmatprep.mubr.bf16.mxu0 %v982
  %1290 = vmatmul.mubr.bf16.gmra.mrb[0].mxu0 %v981
  %v1291 = vpop.f32.mrb[0].mxu0
  %v1292 = vadd.f32 %v1020, %v1291
  %v1293 = vpop.f32.mrb[0].mxu0
  %v1294 = vadd.f32 %v1024, %v1293
  %v1295 = vpop.f32.mrb[0].mxu0
  %v1296 = vadd.f32 %v1020, %v1295
  %v1297 = vpop.f32.mrb[0].mxu0
  %v1298 = vadd.f32 %v1024, %v1297
  %1299 = vdwg.mxu0
  %v1300 = vpack.c.bf16 %v1226, %v1222
  %v1301 = vpack.c.bf16 %v1228, %v1224
  %v1302 = vpack.c.bf16 %v1236, %v1232
  %v1303 = vpack.c.bf16 %v1238, %v1234
  %v1304 = vpack.c.bf16 %v1246, %v1242
  %v1305 = vpack.c.bf16 %v1248, %v1244
  %v1306 = vpack.c.bf16 %v1256, %v1252
  %v1307 = vpack.c.bf16 %v1258, %v1254
  %v1308 = vpack.c.bf16 %v1266, %v1262
  %v1309 = vpack.c.bf16 %v1268, %v1264
  %v1310 = vpack.c.bf16 %v1276, %v1272
  %v1311 = vpack.c.bf16 %v1278, %v1274
  %v1312 = vpack.c.bf16 %v1286, %v1282
  %v1313 = vpack.c.bf16 %v1288, %v1284
  %v1314 = vpack.c.bf16 %v1296, %v1292
  %v1315 = vpack.c.bf16 %v1298, %v1294
  %v1316 = vmin.bf16 %v1300, 0
  %v1317 = vmin.bf16 %v1301, 0
  %v1318 = vmin.bf16 %v1302, 0
  %v1319 = vmin.bf16 %v1303, 0
  %v1320 = vmin.bf16 %v1304, 0
  %v1321 = vmin.bf16 %v1305, 0
  %v1322 = vmin.bf16 %v1306, 0
  %v1323 = vmin.bf16 %v1307, 0
  %v1324 = vmin.bf16 %v1308, 0
  %v1325 = vmin.bf16 %v1309, 0
  %v1326 = vmin.bf16 %v1310, 0
  %v1327 = vmin.bf16 %v1311, 0
  %v1328 = vmin.bf16 %v1312, 0
  %v1329 = vmin.bf16 %v1313, 0
  %v1330 = vmin.bf16 %v1314, 0
  %v1331 = vmin.bf16 %v1315, 0
  %v1333 = vmul.bf16 %v1316, 1069105081
  %v1334 = vpow.bf16.pop %v1333
  %v1336 = vmul.bf16 %v1317, 1069105081
  %v1337 = vpow.bf16.pop %v1336
  %v1339 = vmul.bf16 %v1318, 1069105081
  %v1340 = vpow.bf16.pop %v1339
  %v1342 = vmul.bf16 %v1319, 1069105081
  %v1343 = vpow.bf16.pop %v1342
  %v1345 = vmul.bf16 %v1320, 1069105081
  %v1346 = vpow.bf16.pop %v1345
  %v1348 = vmul.bf16 %v1321, 1069105081
  %v1349 = vpow.bf16.pop %v1348
  %v1351 = vmul.bf16 %v1322, 1069105081
  %v1352 = vpow.bf16.pop %v1351
  %v1354 = vmul.bf16 %v1323, 1069105081
  %v1355 = vpow.bf16.pop %v1354
  %v1357 = vmul.bf16 %v1324, 1069105081
  %v1358 = vpow.bf16.pop %v1357
  %v1360 = vmul.bf16 %v1325, 1069105081
  %v1361 = vpow.bf16.pop %v1360
  %v1363 = vmul.bf16 %v1326, 1069105081
  %v1364 = vpow.bf16.pop %v1363
  %v1366 = vmul.bf16 %v1327, 1069105081
  %v1367 = vpow.bf16.pop %v1366
  %v1369 = vmul.bf16 %v1328, 1069105081
  %v1370 = vpow.bf16.pop %v1369
  %v1372 = vmul.bf16 %v1329, 1069105081
  %v1373 = vpow.bf16.pop %v1372
  %v1375 = vmul.bf16 %v1330, 1069105081
  %v1376 = vpow.bf16.pop %v1375
  %v1378 = vmul.bf16 %v1331, 1069105081
  %v1379 = vpow.bf16.pop %v1378
  %v1380 = vsub.bf16 %v1334, 1065369472
  %v1381 = vsub.bf16 %v1337, 1065369472
  %v1382 = vsub.bf16 %v1340, 1065369472
  %v1383 = vsub.bf16 %v1343, 1065369472
  %v1384 = vsub.bf16 %v1346, 1065369472
  %v1385 = vsub.bf16 %v1349, 1065369472
  %v1386 = vsub.bf16 %v1352, 1065369472
  %v1387 = vsub.bf16 %v1355, 1065369472
  %v1388 = vsub.bf16 %v1358, 1065369472
  %v1389 = vsub.bf16 %v1361, 1065369472
  %v1390 = vsub.bf16 %v1364, 1065369472
  %v1391 = vsub.bf16 %v1367, 1065369472
  %v1392 = vsub.bf16 %v1370, 1065369472
  %v1393 = vsub.bf16 %v1373, 1065369472
  %v1394 = vsub.bf16 %v1376, 1065369472
  %v1395 = vsub.bf16 %v1379, 1065369472
  %v1396 = vmul.bf16 %v1380, 1071005654
  %v1397 = vmul.bf16 %v1381, 1071005654
  %v1398 = vmul.bf16 %v1382, 1071005654
  %v1399 = vmul.bf16 %v1383, 1071005654
  %v1400 = vmul.bf16 %v1384, 1071005654
  %v1401 = vmul.bf16 %v1385, 1071005654
  %v1402 = vmul.bf16 %v1386, 1071005654
  %v1403 = vmul.bf16 %v1387, 1071005654
  %v1404 = vmul.bf16 %v1388, 1071005654
  %v1405 = vmul.bf16 %v1389, 1071005654
  %v1406 = vmul.bf16 %v1390, 1071005654
  %v1407 = vmul.bf16 %v1391, 1071005654
  %v1408 = vmul.bf16 %v1392, 1071005654
  %v1409 = vmul.bf16 %v1393, 1071005654
  %v1410 = vmul.bf16 %v1394, 1071005654
  %v1411 = vmul.bf16 %v1395, 1071005654
  %vm1412 = vcmp.gt.bf16.partialorder %v1300, 0
  %vm1413 = vcmp.gt.bf16.partialorder %v1301, 0
  %vm1414 = vcmp.gt.bf16.partialorder %v1302, 0
  %vm1415 = vcmp.gt.bf16.partialorder %v1303, 0
  %vm1416 = vcmp.gt.bf16.partialorder %v1304, 0
  %vm1417 = vcmp.gt.bf16.partialorder %v1305, 0
  %vm1418 = vcmp.gt.bf16.partialorder %v1306, 0
  %vm1419 = vcmp.gt.bf16.partialorder %v1307, 0
  %vm1420 = vcmp.gt.bf16.partialorder %v1308, 0
  %vm1421 = vcmp.gt.bf16.partialorder %v1309, 0
  %vm1422 = vcmp.gt.bf16.partialorder %v1310, 0
  %vm1423 = vcmp.gt.bf16.partialorder %v1311, 0
  %vm1424 = vcmp.gt.bf16.partialorder %v1312, 0
  %vm1425 = vcmp.gt.bf16.partialorder %v1313, 0
  %vm1426 = vcmp.gt.bf16.partialorder %v1314, 0
  %vm1427 = vcmp.gt.bf16.partialorder %v1315, 0
  %v1428 = vsel %vm1412, %v1300, %v1396
  %v1429 = vsel %vm1413, %v1301, %v1397
  %v1430 = vsel %vm1414, %v1302, %v1398
  %v1431 = vsel %vm1415, %v1303, %v1399
  %v1432 = vsel %vm1416, %v1304, %v1400
  %v1433 = vsel %vm1417, %v1305, %v1401
  %v1434 = vsel %vm1418, %v1306, %v1402
  %v1435 = vsel %vm1419, %v1307, %v1403
  %v1436 = vsel %vm1420, %v1308, %v1404
  %v1437 = vsel %vm1421, %v1309, %v1405
  %v1438 = vsel %vm1422, %v1310, %v1406
  %v1439 = vsel %vm1423, %v1311, %v1407
  %v1440 = vsel %vm1424, %v1312, %v1408
  %v1441 = vsel %vm1425, %v1313, %v1409
  %v1442 = vsel %vm1426, %v1314, %v1410
  %v1443 = vsel %vm1427, %v1315, %v1411
  %v1444 = vmul.bf16 %v1428, 1065762694
  %v1445 = vmul.bf16 %v1429, 1065762694
  %v1446 = vmul.bf16 %v1430, 1065762694
  %v1447 = vmul.bf16 %v1431, 1065762694
  %v1448 = vmul.bf16 %v1432, 1065762694
  %v1449 = vmul.bf16 %v1433, 1065762694
  %v1450 = vmul.bf16 %v1434, 1065762694
  %v1451 = vmul.bf16 %v1435, 1065762694
  %v1452 = vmul.bf16 %v1436, 1065762694
  %v1453 = vmul.bf16 %v1437, 1065762694
  %v1454 = vmul.bf16 %v1438, 1065762694
  %v1455 = vmul.bf16 %v1439, 1065762694
  %v1456 = vmul.bf16 %v1440, 1065762694
  %v1457 = vmul.bf16 %v1441, 1065762694
  %v1458 = vmul.bf16 %v1442, 1065762694
  %v1459 = vmul.bf16 %v1443, 1065762694
  %v1460 = vld [vmem:[%s7] sm:$0xf]
  %v1461 = vld [vmem:[%s7 + $0x4] sm:$0xf]
  %v1462 = vld [vmem:[%s7 + $0x8] sm:$0xf]
  %v1463 = vld [vmem:[%s7 + $0xc] sm:$0xf]
  %v1464 = vld [vmem:[%s7 + $0x10] sm:$0xf]
  %v1465 = vld [vmem:[%s7 + $0x14] sm:$0xf]
  %v1466 = vld [vmem:[%s7 + $0x18] sm:$0xf]
  %v1467 = vld [vmem:[%s7 + $0x1c] sm:$0xf]
  %v1468 = vld [vmem:[%s7 + $0x20] sm:$0xf]
  %v1469 = vld [vmem:[%s7 + $0x24] sm:$0xf]
  %v1470 = vld [vmem:[%s7 + $0x28] sm:$0xf]
  %v1471 = vld [vmem:[%s7 + $0x2c] sm:$0xf]
  %v1472 = vld [vmem:[%s7 + $0x30] sm:$0xf]
  %v1473 = vld [vmem:[%s7 + $0x34] sm:$0xf]
  %v1474 = vld [vmem:[%s7 + $0x38] sm:$0xf]
  %v1475 = vld [vmem:[%s7 + $0x3c] sm:$0xf]
  %v1476 = vld [vmem:[%s7 + $0x40] sm:$0xf]
  %v1477 = vld [vmem:[%s7 + $0x44] sm:$0xf]
  %v1478 = vld [vmem:[%s7 + $0x48] sm:$0xf]
  %v1479 = vld [vmem:[%s7 + $0x4c] sm:$0xf]
  %v1480 = vld [vmem:[%s7 + $0x50] sm:$0xf]
  %v1481 = vld [vmem:[%s7 + $0x54] sm:$0xf]
  %v1482 = vld [vmem:[%s7 + $0x58] sm:$0xf]
  %v1483 = vld [vmem:[%s7 + $0x5c] sm:$0xf]
  %v1484 = vld [vmem:[%s7 + $0x60] sm:$0xf]
  %v1485 = vld [vmem:[%s7 + $0x64] sm:$0xf]
  %v1486 = vld [vmem:[%s7 + $0x68] sm:$0xf]
  %v1487 = vld [vmem:[%s7 + $0x6c] sm:$0xf]
  %v1488 = vld [vmem:[%s7 + $0x70] sm:$0xf]
  %v1489 = vld [vmem:[%s7 + $0x74] sm:$0xf]
  %v1490 = vld [vmem:[%s7 + $0x78] sm:$0xf]
  %v1491 = vld [vmem:[%s7 + $0x7c] sm:$0xf]
  %v1492 = vld [vmem:[%s8] sm:$0x1]
  %v1494 = vlaneseq
  %v1495 = vshrl.u32 %v1494, 7
  %v1496 = vsub.s32 0, %v1495
  %v1497 = vrot.slane %v1492, %v1496
  %v1531 = vunpack.c.l.b16 %v1460
  %v1532 = vunpack.c.l.b16 %v1461
  %v1533 = vunpack.c.l.b16 %v1462
  %v1534 = vunpack.c.l.b16 %v1463
  %v1535 = vunpack.c.l.b16 %v1464
  %v1536 = vunpack.c.l.b16 %v1465
  %v1537 = vunpack.c.l.b16 %v1466
  %v1538 = vunpack.c.l.b16 %v1467
  %v1539 = vunpack.c.l.b16 %v1468
  %v1540 = vunpack.c.l.b16 %v1469
  %v1541 = vunpack.c.l.b16 %v1470
  %v1542 = vunpack.c.l.b16 %v1471
  %v1543 = vunpack.c.l.b16 %v1472
  %v1544 = vunpack.c.l.b16 %v1473
  %v1545 = vunpack.c.l.b16 %v1474
  %v1546 = vunpack.c.l.b16 %v1475
  %v1547 = vunpack.c.l.b16 %v1476
  %v1548 = vunpack.c.l.b16 %v1477
  %v1549 = vunpack.c.l.b16 %v1478
  %v1550 = vunpack.c.l.b16 %v1479
  %v1551 = vunpack.c.l.b16 %v1480
  %v1552 = vunpack.c.l.b16 %v1481
  %v1553 = vunpack.c.l.b16 %v1482
  %v1554 = vunpack.c.l.b16 %v1483
  %v1555 = vunpack.c.l.b16 %v1484
  %v1556 = vunpack.c.l.b16 %v1485
  %v1557 = vunpack.c.l.b16 %v1486
  %v1558 = vunpack.c.l.b16 %v1487
  %v1559 = vunpack.c.l.b16 %v1488
  %v1560 = vunpack.c.l.b16 %v1489
  %v1561 = vunpack.c.l.b16 %v1490
  %v1562 = vunpack.c.l.b16 %v1491
  %v1563 = vpack.c.b16 %v1532, %v1531
  %v1564 = vpack.c.b16 %v1534, %v1533
  %v1565 = vpack.c.b16 %v1536, %v1535
  %v1566 = vpack.c.b16 %v1538, %v1537
  %v1567 = vpack.c.b16 %v1540, %v1539
  %v1568 = vpack.c.b16 %v1542, %v1541
  %v1569 = vpack.c.b16 %v1544, %v1543
  %v1570 = vpack.c.b16 %v1546, %v1545
  %v1571 = vpack.c.b16 %v1548, %v1547
  %v1572 = vpack.c.b16 %v1550, %v1549
  %v1573 = vpack.c.b16 %v1552, %v1551
  %v1574 = vpack.c.b16 %v1554, %v1553
  %v1575 = vpack.c.b16 %v1556, %v1555
  %v1576 = vpack.c.b16 %v1558, %v1557
  %v1577 = vpack.c.b16 %v1560, %v1559
  %v1578 = vpack.c.b16 %v1562, %v1561
  %1595 = vmatprep.subr.bf16.mxu0 0
  %1596 = vmatpush1.bf16.msra.mxu0 %v1563
  %1597 = vmatprep.subr.bf16.mxu0 0
  %1598 = vmatpush1.bf16.msra.mxu0 %v1564
  %1599 = vmatprep.subr.bf16.mxu0 0
  %1600 = vmatpush1.bf16.msra.mxu0 %v1565
  %1601 = vmatprep.subr.bf16.mxu0 0
  %1602 = vmatpush1.bf16.msra.mxu0 %v1566
  %1603 = vmatprep.subr.bf16.mxu0 0
  %1604 = vmatpush1.bf16.msra.mxu0 %v1567
  %1605 = vmatprep.subr.bf16.mxu0 0
  %1606 = vmatpush1.bf16.msra.mxu0 %v1568
  %1607 = vmatprep.subr.bf16.mxu0 0
  %1608 = vmatpush1.bf16.msra.mxu0 %v1569
  %1609 = vmatprep.subr.bf16.mxu0 0
  %1610 = vmatpush1.bf16.msra.mxu0 %v1570
  %1611 = vmatprep.subr.bf16.mxu0 0
  %1612 = vmatpush1.bf16.msra.mxu0 %v1571
  %1613 = vmatprep.subr.bf16.mxu0 0
  %1614 = vmatpush1.bf16.msra.mxu0 %v1572
  %1615 = vmatprep.subr.bf16.mxu0 0
  %1616 = vmatpush1.bf16.msra.mxu0 %v1573
  %1617 = vmatprep.subr.bf16.mxu0 0
  %1618 = vmatpush1.bf16.msra.mxu0 %v1574
  %1619 = vmatprep.subr.bf16.mxu0 0
  %1620 = vmatpush1.bf16.msra.mxu0 %v1575
  %1621 = vmatprep.subr.bf16.mxu0 0
  %1622 = vmatpush1.bf16.msra.mxu0 %v1576
  %1623 = vmatprep.subr.bf16.mxu0 0
  %1624 = vmatpush1.bf16.msra.mxu0 %v1577
  %1625 = vmatprep.subr.bf16.mxu0 0
  %1626 = vmatpush1.bf16.msra.mxu0 %v1578
  %1627 = vmatprep.mubr.bf16.mxu0 %v1445
  %1628 = vmatmul.mubr.bf16.gmra.mrb[0].mxu0 %v1444
  %v1629 = vpop.f32.mrb[0].mxu0
  %v1630 = vadd.f32 %v1497, %v1629
  %v1631 = vpop.f32.mrb[0].mxu0
  %v1632 = vpop.f32.mrb[0].mxu0
  %v1633 = vadd.f32 %v1497, %v1632
  %v1634 = vpop.f32.mrb[0].mxu0
  %1635 = vmatprep.mubr.bf16.mxu0 %v1447
  %1636 = vmatmul.mubr.bf16.gmra.mrb[0].mxu0 %v1446
  %v1637 = vpop.f32.mrb[0].mxu0
  %v1638 = vadd.f32 %v1497, %v1637
  %v1639 = vpop.f32.mrb[0].mxu0
  %v1640 = vpop.f32.mrb[0].mxu0
  %v1641 = vadd.f32 %v1497, %v1640
  %v1642 = vpop.f32.mrb[0].mxu0
  %1643 = vmatprep.mubr.bf16.mxu0 %v1449
  %1644 = vmatmul.mubr.bf16.gmra.mrb[0].mxu0 %v1448
  %v1645 = vpop.f32.mrb[0].mxu0
  %v1646 = vadd.f32 %v1497, %v1645
  %v1647 = vpop.f32.mrb[0].mxu0
  %v1648 = vpop.f32.mrb[0].mxu0
  %v1649 = vadd.f32 %v1497, %v1648
  %v1650 = vpop.f32.mrb[0].mxu0
  %1651 = vmatprep.mubr.bf16.mxu0 %v1451
  %1652 = vmatmul.mubr.bf16.gmra.mrb[0].mxu0 %v1450
  %v1653 = vpop.f32.mrb[0].mxu0
  %v1654 = vadd.f32 %v1497, %v1653
  %v1655 = vpop.f32.mrb[0].mxu0
  %v1656 = vpop.f32.mrb[0].mxu0
  %v1657 = vadd.f32 %v1497, %v1656
  %v1658 = vpop.f32.mrb[0].mxu0
  %1659 = vmatprep.mubr.bf16.mxu0 %v1453
  %1660 = vmatmul.mubr.bf16.gmra.mrb[0].mxu0 %v1452
  %v1661 = vpop.f32.mrb[0].mxu0
  %v1662 = vadd.f32 %v1497, %v1661
  %v1663 = vpop.f32.mrb[0].mxu0
  %v1664 = vpop.f32.mrb[0].mxu0
  %v1665 = vadd.f32 %v1497, %v1664
  %v1666 = vpop.f32.mrb[0].mxu0
  %1667 = vmatprep.mubr.bf16.mxu0 %v1455
  %1668 = vmatmul.mubr.bf16.gmra.mrb[0].mxu0 %v1454
  %v1669 = vpop.f32.mrb[0].mxu0
  %v1670 = vadd.f32 %v1497, %v1669
  %v1671 = vpop.f32.mrb[0].mxu0
  %v1672 = vpop.f32.mrb[0].mxu0
  %v1673 = vadd.f32 %v1497, %v1672
  %v1674 = vpop.f32.mrb[0].mxu0
  %1675 = vmatprep.mubr.bf16.mxu0 %v1457
  %1676 = vmatmul.mubr.bf16.gmra.mrb[0].mxu0 %v1456
  %v1677 = vpop.f32.mrb[0].mxu0
  %v1678 = vadd.f32 %v1497, %v1677
  %v1679 = vpop.f32.mrb[0].mxu0
  %v1680 = vpop.f32.mrb[0].mxu0
  %v1681 = vadd.f32 %v1497, %v1680
  %v1682 = vpop.f32.mrb[0].mxu0
  %1683 = vmatprep.mubr.bf16.mxu0 %v1459
  %1684 = vmatmul.mubr.bf16.gmra.mrb[0].mxu0 %v1458
  %v1685 = vpop.f32.mrb[0].mxu0
  %v1686 = vadd.f32 %v1497, %v1685
  %v1687 = vpop.f32.mrb[0].mxu0
  %v1688 = vpop.f32.mrb[0].mxu0
  %v1689 = vadd.f32 %v1497, %v1688
  %v1690 = vpop.f32.mrb[0].mxu0
  %1691 = vdwg.mxu0
  %v1692 = vpack.c.bf16 %v1633, %v1630
  %v1693 = vpack.c.bf16 %v1641, %v1638
  %v1694 = vpack.c.bf16 %v1649, %v1646
  %v1695 = vpack.c.bf16 %v1657, %v1654
  %v1696 = vpack.c.bf16 %v1665, %v1662
  %v1697 = vpack.c.bf16 %v1673, %v1670
  %v1698 = vpack.c.bf16 %v1681, %v1678
  %v1699 = vpack.c.bf16 %v1689, %v1686
  %v1708 = vunpack.c.l.b16 %v1692
  %v1709 = vunpack.c.h.b16 %v1692
  %v1710 = vunpack.c.l.b16 %v1693
  %v1711 = vunpack.c.h.b16 %v1693
  %v1712 = vunpack.c.l.b16 %v1694
  %v1713 = vunpack.c.h.b16 %v1694
  %v1714 = vunpack.c.l.b16 %v1695
  %v1715 = vunpack.c.h.b16 %v1695
  %v1716 = vunpack.c.l.b16 %v1696
  %v1717 = vunpack.c.h.b16 %v1696
  %v1718 = vunpack.c.l.b16 %v1697
  %v1719 = vunpack.c.h.b16 %v1697
  %v1720 = vunpack.c.l.b16 %v1698
  %v1721 = vunpack.c.h.b16 %v1698
  %v1722 = vunpack.c.l.b16 %v1699
  %v1723 = vunpack.c.h.b16 %v1699
  %v1724 = vpack.c.b16 %v1708, %v1708
  %v1725 = vpack.c.b16 %v1709, %v1709
  %v1726 = vpack.c.b16 %v1710, %v1710
  %v1727 = vpack.c.b16 %v1711, %v1711
  %v1728 = vpack.c.b16 %v1712, %v1712
  %v1729 = vpack.c.b16 %v1713, %v1713
  %v1730 = vpack.c.b16 %v1714, %v1714
  %v1731 = vpack.c.b16 %v1715, %v1715
  %v1732 = vpack.c.b16 %v1716, %v1716
  %v1733 = vpack.c.b16 %v1717, %v1717
  %v1734 = vpack.c.b16 %v1718, %v1718
  %v1735 = vpack.c.b16 %v1719, %v1719
  %v1736 = vpack.c.b16 %v1720, %v1720
  %v1737 = vpack.c.b16 %v1721, %v1721
  %v1738 = vpack.c.b16 %v1722, %v1722
  %v1739 = vpack.c.b16 %v1723, %v1723
  %1756 = vst [vmem:[%s9] sm:$0xf] %v1724
  %1757 = vst [vmem:[%s9 + $0x4] sm:$0xf] %v1725
  %1758 = vst [vmem:[%s9 + $0x8] sm:$0xf] %v1726
  %1759 = vst [vmem:[%s9 + $0xc] sm:$0xf] %v1727
  %1760 = vst [vmem:[%s9 + $0x10] sm:$0xf] %v1728
  %1761 = vst [vmem:[%s9 + $0x14] sm:$0xf] %v1729
  %1762 = vst [vmem:[%s9 + $0x18] sm:$0xf] %v1730
  %1763 = vst [vmem:[%s9 + $0x1c] sm:$0xf] %v1731
  %1764 = vst [vmem:[%s9 + $0x20] sm:$0xf] %v1732
  %1765 = vst [vmem:[%s9 + $0x24] sm:$0xf] %v1733
  %1766 = vst [vmem:[%s9 + $0x28] sm:$0xf] %v1734
  %1767 = vst [vmem:[%s9 + $0x2c] sm:$0xf] %v1735
  %1768 = vst [vmem:[%s9 + $0x30] sm:$0xf] %v1736
  %1769 = vst [vmem:[%s9 + $0x34] sm:$0xf] %v1737
  %1770 = vst [vmem:[%s9 + $0x38] sm:$0xf] %v1738
  %1771 = vst [vmem:[%s9 + $0x3c] sm:$0xf] %v1739
  // Predicated region
  $region38: #{mlp_forward.1} parent=0 // pred_check
    _
  $region39: #{mlp_forward.1} parent=0 // pred_check_branch
    %1773 = sbr.rel (0) target = $region41
  $region40: #{mlp_forward.1} parent=0 // pred_region
    _
  $region41: #{mlp_forward.1} parent=0 // pred_fallthru
    _
  // Predicated region
  $region42: #{mlp_forward.1} parent=0 // pred_check
    _
  $region43: #{mlp_forward.1} parent=0 // pred_check_branch
    %1775 = sbr.rel (0) target = $region45
  $region44: #{mlp_forward.1} parent=0 // pred_region
    _
  $region45: #{mlp_forward.1} parent=0 // pred_fallthru
    _

</llo_original>
